<compile_context>
chip_gen: v7x
topology: tpu7x:2x2x1
jax: 0.10.0
libtpu: 0.0.40
codegen_flags: <defaults>
</compile_context>

<pallas_src>
import functools

import jax
import jax.numpy as jnp
from jax.experimental import pallas as pl
from jax.experimental.pallas import tpu as pltpu


# ----------------------------------------------------------------------------
# Fused kernel: LSTM layer 1 + LSTM layer 2 (wavefront) -> FC head, all in VMEM.
# ----------------------------------------------------------------------------
def _lstm_model_kernel(x_ref, wih1_ref, whh1_ref, b1_ref,
                       w2_ref, b2_ref, fcw_ref, fcb_ref,
                       out_ref, gx1_ref, *, T, B, H):
    # ---- hoisted: layer-1 input projection over the whole sequence ----------
    # One (T*B, D) @ (D, 4H) matmul; result parked in VMEM scratch so the
    # unrolled time loop re-loads aligned (B, 4H) slices instead of keeping
    # the full gx sequence live in vregs.
    gx1_ref[...] = (
        jnp.dot(x_ref[...], wih1_ref[...], preferred_element_type=jnp.float32)
        + b1_ref[...])

    whh1 = whh1_ref[...]        # (H, 4H)  bf16
    w2 = w2_ref[...]            # (2H, 4H) bf16, fused [W_ih2^T ; W_hh2^T]
    b2 = b2_ref[...]            # (1, 4H)  f32

    def cell(gates, c, first):
        # Single full-width EUP pass: sigmoid over all 4 gate pre-activations.
        # The g-gate columns were pre-scaled by 2 in the wrapper, so tanh(a_g)
        # is recovered as 2*sigmoid(2*a_g) - 1 with a cheap VPU fixup.
        s = jax.nn.sigmoid(gates)
        i_g = s[:, 0 * H:1 * H]
        f_g = s[:, 1 * H:2 * H]
        g_g = 2.0 * s[:, 2 * H:3 * H] - 1.0
        o_g = s[:, 3 * H:4 * H]
        c_new = i_g * g_g if first else f_g * c + i_g * g_g
        h_new = o_g * jnp.tanh(c_new)
        return h_new, c_new

    def layer2_gates(h1_t, h2_prev):
        x2 = jnp.concatenate([h1_t, h2_prev], axis=1).astype(jnp.bfloat16)
        return jnp.dot(x2, w2, preferred_element_type=jnp.float32) + b2

    # ---- wavefront: tick t runs layer-1 step t and layer-2 step t-1 ---------
    # Tick 0: layer-1 step 0 (h = c = 0 -> gates are just gx1[0]; no h @ W_hh).
    h1, c1 = cell(gx1_ref[pl.ds(0, B), :], None, True)
    h2 = jnp.zeros((B, H), jnp.float32)
    c2 = jnp.zeros((B, H), jnp.float32)

    for t in range(1, T):  # static unroll; the two matmuls in a tick are independent
        g1 = gx1_ref[pl.ds(t * B, B), :] + jnp.dot(
            h1.astype(jnp.bfloat16), whh1, preferred_element_type=jnp.float32)
        g2 = layer2_gates(h1, h2)            # uses h1_{t-1}, h2_{t-2} (old values)
        h1, c1 = cell(g1, c1, False)
        h2, c2 = cell(g2, c2, t == 1)

    # Final tick: layer-2 step T-1.
    g2 = layer2_gates(h1, h2)
    h2, _ = cell(g2, c2, T == 1)

    # ---- FC head on the last timestep (dropout = identity in eval mode) -----
    # Output is a lane-dense (B_pad, O_pad=128) slab; wrapper slices it back.
    out_ref[...] = (
        jnp.dot(h2.astype(jnp.bfloat16), fcw_ref[...],
                preferred_element_type=jnp.float32)
        + fcb_ref[...])


# ----------------------------------------------------------------------------
# Model wrapper (mirrors LSTMModel.forward, eval mode, num_layers=2).
# ----------------------------------------------------------------------------
def lstm_model_forward(x_btd, params):
    """x_btd: (B, T, input_size), batch_first like the PyTorch module."""
    assert len(params["lstm"]) == 2, "fused kernel is specialized to num_layers=2"
    B, T, D = x_btd.shape
    H = params["lstm"][0]["whh_t"].shape[0]
    O = params["fc_b"].shape[-1]

    B_pad = ((B + 7) // 8) * 8          # sublane-full batch
    O_pad = ((O + 127) // 128) * 128    # lane-dense FC output

    x_pad = jnp.pad(x_btd, ((0, B_pad - B), (0, 0), (0, 0)))
    # time-major, flattened: row t*B_pad + b  <->  (time t, batch b)
    x_2d = jnp.transpose(x_pad, (1, 0, 2)).reshape(T * B_pad, D).astype(jnp.bfloat16)

    def fold_g_scale(w):
        # Fold the tanh -> sigmoid rewrite (x2 on the g-gate pre-activation)
        # into the weight/bias columns so the kernel needs no per-step scaling.
        return w.at[..., 2 * H:3 * H].multiply(2.0)

    l1, l2 = params["lstm"]
    wih1 = fold_g_scale(l1["wih_t"]).astype(jnp.bfloat16)                  # (D, 4H)
    whh1 = fold_g_scale(l1["whh_t"]).astype(jnp.bfloat16)                  # (H, 4H)
    b1 = fold_g_scale(l1["b"])                                             # (1, 4H) f32
    w2 = fold_g_scale(
        jnp.concatenate([l2["wih_t"], l2["whh_t"]], axis=0)
    ).astype(jnp.bfloat16)                                                 # (2H, 4H)
    b2 = fold_g_scale(l2["b"])                                             # (1, 4H) f32
    fcw = jnp.pad(params["fc_w_t"], ((0, 0), (0, O_pad - O))).astype(jnp.bfloat16)
    fcb = jnp.pad(params["fc_b"], ((0, 0), (0, O_pad - O)))

    vmem = pl.BlockSpec(memory_space=pltpu.MemorySpace.VMEM)  # full-array residency
    kernel = functools.partial(_lstm_model_kernel, T=T, B=B_pad, H=H)
    out_pad = pl.pallas_call(
        kernel,
        out_shape=jax.ShapeDtypeStruct((B_pad, O_pad), jnp.float32),
        in_specs=[vmem] * 8,
        out_specs=vmem,
        scratch_shapes=[pltpu.VMEM((T * B_pad, 4 * H), jnp.float32)],
        # Tiny footprint at this size (~100 KiB); budget it explicitly.  For
        # large T/H/B, tile over T with a grid instead of raising this further.
        compiler_params=pltpu.CompilerParams(vmem_limit_bytes=32 * 1024 * 1024),
    )(x_2d, wih1, whh1, b1, w2, b2, fcw, fcb)

    return out_pad[:B, :O]


# ----------------------------------------------------------------------------
# Deterministic parameter init (PyTorch-style uniform(-1/sqrt(H), 1/sqrt(H))).
# ----------------------------------------------------------------------------
def init_params(key, input_size, hidden_size, num_layers, output_size):
    params = {"lstm": []}
    bound = 1.0 / jnp.sqrt(hidden_size)
    for layer in range(num_layers):
        d_in = input_size if layer == 0 else hidden_size
        key, k1, k2, k3, k4 = jax.random.split(key, 5)
        wih = jax.random.uniform(k1, (4 * hidden_size, d_in), jnp.float32, -bound, bound)
        whh = jax.random.uniform(k2, (4 * hidden_size, hidden_size), jnp.float32, -bound, bound)
        bih = jax.random.uniform(k3, (4 * hidden_size,), jnp.float32, -bound, bound)
        bhh = jax.random.uniform(k4, (4 * hidden_size,), jnp.float32, -bound, bound)
        params["lstm"].append({
            "wih_t": wih.T,                                # (D, 4H)
            "whh_t": whh.T,                                # (H, 4H)
            "b": (bih + bhh).reshape(1, 4 * hidden_size),  # (1, 4H)
        })
    key, k5, k6 = jax.random.split(key, 3)
    fb = 1.0 / jnp.sqrt(hidden_size)
    fw = jax.random.uniform(k5, (output_size, hidden_size), jnp.float32, -fb, fb)
    fbias = jax.random.uniform(k6, (output_size,), jnp.float32, -fb, fb)
    params["fc_w_t"] = fw.T                         # (H, O)
    params["fc_b"] = fbias.reshape(1, output_size)  # (1, O)
    return params


# ----------------------------------------------------------------------------
# Pure-JAX reference (f32 everywhere, for correctness check).
# ----------------------------------------------------------------------------
def reference_forward(x_btd, params):
    B = x_btd.shape[0]
    H = params["lstm"][0]["whh_t"].shape[0]
    h_seq = jnp.transpose(x_btd, (1, 0, 2))
    for layer in params["lstm"]:
        def step(carry, x_t, layer=layer):
            h, c = carry
            gates = x_t @ layer["wih_t"] + h @ layer["whh_t"] + layer["b"]
            i_g = jax.nn.sigmoid(gates[:, 0 * H:1 * H])
            f_g = jax.nn.sigmoid(gates[:, 1 * H:2 * H])
            g_g = jnp.tanh(gates[:, 2 * H:3 * H])
            o_g = jax.nn.sigmoid(gates[:, 3 * H:4 * H])
            c_new = f_g * c + i_g * g_g
            h_new = o_g * jnp.tanh(c_new)
            return (h_new, c_new), h_new
        init = (jnp.zeros((B, H), jnp.float32), jnp.zeros((B, H), jnp.float32))
        _, h_seq = jax.lax.scan(step, init, h_seq)
    return h_seq[-1] @ params["fc_w_t"] + params["fc_b"]


if __name__ == "__main__":
    B, T, INPUT, HIDDEN, LAYERS, OUT = 2, 8, 4, 32, 2, 1

    key = jax.random.PRNGKey(0)
    kx, kp = jax.random.split(key)
    x = jax.random.normal(kx, (B, T, INPUT), jnp.float32)
    params = init_params(kp, INPUT, HIDDEN, LAYERS, OUT)

    out = lstm_model_forward(x, params)
    jax.block_until_ready(out)
    assert out.shape == (B, OUT), out.shape

    ref = reference_forward(x, params)
    # bf16 MXU operands (f32 accumulation / f32 state) per the perf review ->
    # tolerance loosened vs the pure-f32 reference.
    assert jnp.allclose(out, ref, atol=3e-2, rtol=3e-2), (out, ref)

    print("KERNEL_OK")
</pallas_src>

<mosaic_0001>
module attributes {stable_mosaic.version = 11 : i64} {
  func.func @_lstm_model_kernel(%arg0: memref<64x4xbf16, #tpu.memory_space<vmem>>, %arg1: memref<4x128xbf16, #tpu.memory_space<vmem>>, %arg2: memref<32x128xbf16, #tpu.memory_space<vmem>>, %arg3: memref<1x128xf32, #tpu.memory_space<vmem>>, %arg4: memref<64x128xbf16, #tpu.memory_space<vmem>>, %arg5: memref<1x128xf32, #tpu.memory_space<vmem>>, %arg6: memref<32x128xbf16, #tpu.memory_space<vmem>>, %arg7: memref<1x128xf32, #tpu.memory_space<vmem>>, %arg8: memref<8x128xf32, #tpu.memory_space<vmem>>, %arg9: memref<64x128xf32, #tpu.memory_space<vmem>>) attributes {dimension_semantics = [], scalar_prefetch = 0 : i64, scratch_operands = 1 : i64, tpu.core_type = #tpu.core_type<tc>} {
    %c0 = arith.constant 0 : index
    %c0_0 = arith.constant 0 : index
    %0 = vector.load %arg0[%c0, %c0_0] : memref<64x4xbf16, #tpu.memory_space<vmem>>, vector<64x4xbf16>
    %c0_1 = arith.constant 0 : index
    %c0_2 = arith.constant 0 : index
    %1 = vector.load %arg1[%c0_1, %c0_2] : memref<4x128xbf16, #tpu.memory_space<vmem>>, vector<4x128xbf16>
    %cst = arith.constant dense<0.000000e+00> : vector<64x128xf32>
    %2 = tpu.matmul %0, %1, %cst {dimension_numbers = #tpu.dot_dimension_numbers<[1], [0], [0], [1], [0, 0, 1, 1], [], []>} : vector<64x4xbf16>, vector<4x128xbf16>, vector<64x128xf32> -> vector<64x128xf32>
    %c0_3 = arith.constant 0 : index
    %c0_4 = arith.constant 0 : index
    %3 = vector.load %arg3[%c0_3, %c0_4] : memref<1x128xf32, #tpu.memory_space<vmem>>, vector<1x128xf32>
    %4 = vector.broadcast %3 : vector<1x128xf32> to vector<64x128xf32>
    %5 = arith.addf %2, %4 : vector<64x128xf32>
    %c0_5 = arith.constant 0 : index
    %c0_6 = arith.constant 0 : index
    %6 = vector.load %arg9[%c0_5, %c0_6] : memref<64x128xf32, #tpu.memory_space<vmem>>, vector<64x128xf32>
    tpu.vector_store %arg9[%c0_5, %c0_6], %5 {strides = array<i32>} : memref<64x128xf32, #tpu.memory_space<vmem>>, vector<64x128xf32>,
    %c0_7 = arith.constant 0 : index
    %c0_8 = arith.constant 0 : index
    %7 = vector.load %arg2[%c0_7, %c0_8] : memref<32x128xbf16, #tpu.memory_space<vmem>>, vector<32x128xbf16>
    %c0_9 = arith.constant 0 : index
    %c0_10 = arith.constant 0 : index
    %8 = vector.load %arg4[%c0_9, %c0_10] : memref<64x128xbf16, #tpu.memory_space<vmem>>, vector<64x128xbf16>
    %c0_11 = arith.constant 0 : index
    %c0_12 = arith.constant 0 : index
    %9 = vector.load %arg5[%c0_11, %c0_12] : memref<1x128xf32, #tpu.memory_space<vmem>>, vector<1x128xf32>
    %c0_13 = arith.constant 0 : index
    %c0_14 = arith.constant 0 : index
    %10 = vector.load %arg9[%c0_13, %c0_14] : memref<64x128xf32, #tpu.memory_space<vmem>>, vector<8x128xf32>
    %11 = arith.negf %10 : vector<8x128xf32>
    %12 = math.exp %11 : vector<8x128xf32>
    %cst_15 = arith.constant 1.000000e+00 : f32
    %13 = vector.broadcast %cst_15 : f32 to vector<8x128xf32>
    %14 = arith.addf %13, %12 : vector<8x128xf32>
    %15 = arith.divf %13, %14 : vector<8x128xf32>
    %16 = vector.extract_strided_slice %15 {offsets = [0, 0], sizes = [8, 32], strides = [1, 1]} : vector<8x128xf32> to vector<8x32xf32>
    %17 = vector.extract_strided_slice %15 {offsets = [0, 64], sizes = [8, 32], strides = [1, 1]} : vector<8x128xf32> to vector<8x32xf32>
    %cst_16 = arith.constant 2.000000e+00 : f32
    %18 = vector.broadcast %cst_16 : f32 to vector<8x32xf32>
    %19 = arith.mulf %18, %17 : vector<8x32xf32>
    %cst_17 = arith.constant 1.000000e+00 : f32
    %20 = vector.broadcast %cst_17 : f32 to vector<8x32xf32>
    %21 = arith.subf %19, %20 : vector<8x32xf32>
    %22 = vector.extract_strided_slice %15 {offsets = [0, 96], sizes = [8, 32], strides = [1, 1]} : vector<8x128xf32> to vector<8x32xf32>
    %23 = arith.mulf %16, %21 : vector<8x32xf32>
    %24 = math.tanh %23 : vector<8x32xf32>
    %25 = arith.mulf %22, %24 : vector<8x32xf32>
    %cst_18 = arith.constant 0.000000e+00 : f32
    %26 = vector.broadcast %cst_18 : f32 to vector<8x32xf32>
    %c8 = arith.constant 8 : index
    %c0_19 = arith.constant 0 : index
    %27 = vector.load %arg9[%c8, %c0_19] : memref<64x128xf32, #tpu.memory_space<vmem>>, vector<8x128xf32>
    %28 = arith.truncf %25 : vector<8x32xf32> to vector<8x32xbf16>
    %cst_20 = arith.constant dense<0.000000e+00> : vector<8x128xf32>
    %29 = tpu.matmul %28, %7, %cst_20 {dimension_numbers = #tpu.dot_dimension_numbers<[1], [0], [0], [1], [0, 0, 1, 1], [], []>} : vector<8x32xbf16>, vector<32x128xbf16>, vector<8x128xf32> -> vector<8x128xf32>
    %30 = arith.addf %27, %29 : vector<8x128xf32>
    %31 = tpu.concatenate %25, %26 in 1 : vector<8x32xf32>, vector<8x32xf32> -> vector<8x64xf32>
    %32 = arith.truncf %31 : vector<8x64xf32> to vector<8x64xbf16>
    %cst_21 = arith.constant dense<0.000000e+00> : vector<8x128xf32>
    %33 = tpu.matmul %32, %8, %cst_21 {dimension_numbers = #tpu.dot_dimension_numbers<[1], [0], [0], [1], [0, 0, 1, 1], [], []>} : vector<8x64xbf16>, vector<64x128xbf16>, vector<8x128xf32> -> vector<8x128xf32>
    %34 = vector.broadcast %9 : vector<1x128xf32> to vector<8x128xf32>
    %35 = arith.addf %33, %34 : vector<8x128xf32>
    %36 = arith.negf %30 : vector<8x128xf32>
    %37 = math.exp %36 : vector<8x128xf32>
    %cst_22 = arith.constant 1.000000e+00 : f32
    %38 = vector.broadcast %cst_22 : f32 to vector<8x128xf32>
    %39 = arith.addf %38, %37 : vector<8x128xf32>
    %40 = arith.divf %38, %39 : vector<8x128xf32>
    %41 = vector.extract_strided_slice %40 {offsets = [0, 0], sizes = [8, 32], strides = [1, 1]} : vector<8x128xf32> to vector<8x32xf32>
    %42 = vector.extract_strided_slice %40 {offsets = [0, 32], sizes = [8, 32], strides = [1, 1]} : vector<8x128xf32> to vector<8x32xf32>
    %43 = vector.extract_strided_slice %40 {offsets = [0, 64], sizes = [8, 32], strides = [1, 1]} : vector<8x128xf32> to vector<8x32xf32>
    %cst_23 = arith.constant 2.000000e+00 : f32
    %44 = vector.broadcast %cst_23 : f32 to vector<8x32xf32>
    %45 = arith.mulf %44, %43 : vector<8x32xf32>
    %cst_24 = arith.constant 1.000000e+00 : f32
    %46 = vector.broadcast %cst_24 : f32 to vector<8x32xf32>
    %47 = arith.subf %45, %46 : vector<8x32xf32>
    %48 = vector.extract_strided_slice %40 {offsets = [0, 96], sizes = [8, 32], strides = [1, 1]} : vector<8x128xf32> to vector<8x32xf32>
    %49 = arith.mulf %42, %23 : vector<8x32xf32>
    %50 = arith.mulf %41, %47 : vector<8x32xf32>
    %51 = arith.addf %49, %50 : vector<8x32xf32>
    %52 = math.tanh %51 : vector<8x32xf32>
    %53 = arith.mulf %48, %52 : vector<8x32xf32>
    %54 = arith.negf %35 : vector<8x128xf32>
    %55 = math.exp %54 : vector<8x128xf32>
    %cst_25 = arith.constant 1.000000e+00 : f32
    %56 = vector.broadcast %cst_25 : f32 to vector<8x128xf32>
    %57 = arith.addf %56, %55 : vector<8x128xf32>
    %58 = arith.divf %56, %57 : vector<8x128xf32>
    %59 = vector.extract_strided_slice %58 {offsets = [0, 0], sizes = [8, 32], strides = [1, 1]} : vector<8x128xf32> to vector<8x32xf32>
    %60 = vector.extract_strided_slice %58 {offsets = [0, 64], sizes = [8, 32], strides = [1, 1]} : vector<8x128xf32> to vector<8x32xf32>
    %cst_26 = arith.constant 2.000000e+00 : f32
    %61 = vector.broadcast %cst_26 : f32 to vector<8x32xf32>
    %62 = arith.mulf %61, %60 : vector<8x32xf32>
    %cst_27 = arith.constant 1.000000e+00 : f32
    %63 = vector.broadcast %cst_27 : f32 to vector<8x32xf32>
    %64 = arith.subf %62, %63 : vector<8x32xf32>
    %65 = vector.extract_strided_slice %58 {offsets = [0, 96], sizes = [8, 32], strides = [1, 1]} : vector<8x128xf32> to vector<8x32xf32>
    %66 = arith.mulf %59, %64 : vector<8x32xf32>
    %67 = math.tanh %66 : vector<8x32xf32>
    %68 = arith.mulf %65, %67 : vector<8x32xf32>
    %c16 = arith.constant 16 : index
    %c0_28 = arith.constant 0 : index
    %69 = vector.load %arg9[%c16, %c0_28] : memref<64x128xf32, #tpu.memory_space<vmem>>, vector<8x128xf32>
    %70 = arith.truncf %53 : vector<8x32xf32> to vector<8x32xbf16>
    %cst_29 = arith.constant dense<0.000000e+00> : vector<8x128xf32>
    %71 = tpu.matmul %70, %7, %cst_29 {dimension_numbers = #tpu.dot_dimension_numbers<[1], [0], [0], [1], [0, 0, 1, 1], [], []>} : vector<8x32xbf16>, vector<32x128xbf16>, vector<8x128xf32> -> vector<8x128xf32>
    %72 = arith.addf %69, %71 : vector<8x128xf32>
    %73 = tpu.concatenate %53, %68 in 1 : vector<8x32xf32>, vector<8x32xf32> -> vector<8x64xf32>
    %74 = arith.truncf %73 : vector<8x64xf32> to vector<8x64xbf16>
    %cst_30 = arith.constant dense<0.000000e+00> : vector<8x128xf32>
    %75 = tpu.matmul %74, %8, %cst_30 {dimension_numbers = #tpu.dot_dimension_numbers<[1], [0], [0], [1], [0, 0, 1, 1], [], []>} : vector<8x64xbf16>, vector<64x128xbf16>, vector<8x128xf32> -> vector<8x128xf32>
    %76 = vector.broadcast %9 : vector<1x128xf32> to vector<8x128xf32>
    %77 = arith.addf %75, %76 : vector<8x128xf32>
    %78 = arith.negf %72 : vector<8x128xf32>
    %79 = math.exp %78 : vector<8x128xf32>
    %cst_31 = arith.constant 1.000000e+00 : f32
    %80 = vector.broadcast %cst_31 : f32 to vector<8x128xf32>
    %81 = arith.addf %80, %79 : vector<8x128xf32>
    %82 = arith.divf %80, %81 : vector<8x128xf32>
    %83 = vector.extract_strided_slice %82 {offsets = [0, 0], sizes = [8, 32], strides = [1, 1]} : vector<8x128xf32> to vector<8x32xf32>
    %84 = vector.extract_strided_slice %82 {offsets = [0, 32], sizes = [8, 32], strides = [1, 1]} : vector<8x128xf32> to vector<8x32xf32>
    %85 = vector.extract_strided_slice %82 {offsets = [0, 64], sizes = [8, 32], strides = [1, 1]} : vector<8x128xf32> to vector<8x32xf32>
    %cst_32 = arith.constant 2.000000e+00 : f32
    %86 = vector.broadcast %cst_32 : f32 to vector<8x32xf32>
    %87 = arith.mulf %86, %85 : vector<8x32xf32>
    %cst_33 = arith.constant 1.000000e+00 : f32
    %88 = vector.broadcast %cst_33 : f32 to vector<8x32xf32>
    %89 = arith.subf %87, %88 : vector<8x32xf32>
    %90 = vector.extract_strided_slice %82 {offsets = [0, 96], sizes = [8, 32], strides = [1, 1]} : vector<8x128xf32> to vector<8x32xf32>
    %91 = arith.mulf %84, %51 : vector<8x32xf32>
    %92 = arith.mulf %83, %89 : vector<8x32xf32>
    %93 = arith.addf %91, %92 : vector<8x32xf32>
    %94 = math.tanh %93 : vector<8x32xf32>
    %95 = arith.mulf %90, %94 : vector<8x32xf32>
    %96 = arith.negf %77 : vector<8x128xf32>
    %97 = math.exp %96 : vector<8x128xf32>
    %cst_34 = arith.constant 1.000000e+00 : f32
    %98 = vector.broadcast %cst_34 : f32 to vector<8x128xf32>
    %99 = arith.addf %98, %97 : vector<8x128xf32>
    %100 = arith.divf %98, %99 : vector<8x128xf32>
    %101 = vector.extract_strided_slice %100 {offsets = [0, 0], sizes = [8, 32], strides = [1, 1]} : vector<8x128xf32> to vector<8x32xf32>
    %102 = vector.extract_strided_slice %100 {offsets = [0, 32], sizes = [8, 32], strides = [1, 1]} : vector<8x128xf32> to vector<8x32xf32>
    %103 = vector.extract_strided_slice %100 {offsets = [0, 64], sizes = [8, 32], strides = [1, 1]} : vector<8x128xf32> to vector<8x32xf32>
    %cst_35 = arith.constant 2.000000e+00 : f32
    %104 = vector.broadcast %cst_35 : f32 to vector<8x32xf32>
    %105 = arith.mulf %104, %103 : vector<8x32xf32>
    %cst_36 = arith.constant 1.000000e+00 : f32
    %106 = vector.broadcast %cst_36 : f32 to vector<8x32xf32>
    %107 = arith.subf %105, %106 : vector<8x32xf32>
    %108 = vector.extract_strided_slice %100 {offsets = [0, 96], sizes = [8, 32], strides = [1, 1]} : vector<8x128xf32> to vector<8x32xf32>
    %109 = arith.mulf %102, %66 : vector<8x32xf32>
    %110 = arith.mulf %101, %107 : vector<8x32xf32>
    %111 = arith.addf %109, %110 : vector<8x32xf32>
    %112 = math.tanh %111 : vector<8x32xf32>
    %113 = arith.mulf %108, %112 : vector<8x32xf32>
    %c24 = arith.constant 24 : index
    %c0_37 = arith.constant 0 : index
    %114 = vector.load %arg9[%c24, %c0_37] : memref<64x128xf32, #tpu.memory_space<vmem>>, vector<8x128xf32>
    %115 = arith.truncf %95 : vector<8x32xf32> to vector<8x32xbf16>
    %cst_38 = arith.constant dense<0.000000e+00> : vector<8x128xf32>
    %116 = tpu.matmul %115, %7, %cst_38 {dimension_numbers = #tpu.dot_dimension_numbers<[1], [0], [0], [1], [0, 0, 1, 1], [], []>} : vector<8x32xbf16>, vector<32x128xbf16>, vector<8x128xf32> -> vector<8x128xf32>
    %117 = arith.addf %114, %116 : vector<8x128xf32>
    %118 = tpu.concatenate %95, %113 in 1 : vector<8x32xf32>, vector<8x32xf32> -> vector<8x64xf32>
    %119 = arith.truncf %118 : vector<8x64xf32> to vector<8x64xbf16>
    %cst_39 = arith.constant dense<0.000000e+00> : vector<8x128xf32>
    %120 = tpu.matmul %119, %8, %cst_39 {dimension_numbers = #tpu.dot_dimension_numbers<[1], [0], [0], [1], [0, 0, 1, 1], [], []>} : vector<8x64xbf16>, vector<64x128xbf16>, vector<8x128xf32> -> vector<8x128xf32>
    %121 = vector.broadcast %9 : vector<1x128xf32> to vector<8x128xf32>
    %122 = arith.addf %120, %121 : vector<8x128xf32>
    %123 = arith.negf %117 : vector<8x128xf32>
    %124 = math.exp %123 : vector<8x128xf32>
    %cst_40 = arith.constant 1.000000e+00 : f32
    %125 = vector.broadcast %cst_40 : f32 to vector<8x128xf32>
    %126 = arith.addf %125, %124 : vector<8x128xf32>
    %127 = arith.divf %125, %126 : vector<8x128xf32>
    %128 = vector.extract_strided_slice %127 {offsets = [0, 0], sizes = [8, 32], strides = [1, 1]} : vector<8x128xf32> to vector<8x32xf32>
    %129 = vector.extract_strided_slice %127 {offsets = [0, 32], sizes = [8, 32], strides = [1, 1]} : vector<8x128xf32> to vector<8x32xf32>
    %130 = vector.extract_strided_slice %127 {offsets = [0, 64], sizes = [8, 32], strides = [1, 1]} : vector<8x128xf32> to vector<8x32xf32>
    %cst_41 = arith.constant 2.000000e+00 : f32
    %131 = vector.broadcast %cst_41 : f32 to vector<8x32xf32>
    %132 = arith.mulf %131, %130 : vector<8x32xf32>
    %cst_42 = arith.constant 1.000000e+00 : f32
    %133 = vector.broadcast %cst_42 : f32 to vector<8x32xf32>
    %134 = arith.subf %132, %133 : vector<8x32xf32>
    %135 = vector.extract_strided_slice %127 {offsets = [0, 96], sizes = [8, 32], strides = [1, 1]} : vector<8x128xf32> to vector<8x32xf32>
    %136 = arith.mulf %129, %93 : vector<8x32xf32>
    %137 = arith.mulf %128, %134 : vector<8x32xf32>
    %138 = arith.addf %136, %137 : vector<8x32xf32>
    %139 = math.tanh %138 : vector<8x32xf32>
    %140 = arith.mulf %135, %139 : vector<8x32xf32>
    %141 = arith.negf %122 : vector<8x128xf32>
    %142 = math.exp %141 : vector<8x128xf32>
    %cst_43 = arith.constant 1.000000e+00 : f32
    %143 = vector.broadcast %cst_43 : f32 to vector<8x128xf32>
    %144 = arith.addf %143, %142 : vector<8x128xf32>
    %145 = arith.divf %143, %144 : vector<8x128xf32>
    %146 = vector.extract_strided_slice %145 {offsets = [0, 0], sizes = [8, 32], strides = [1, 1]} : vector<8x128xf32> to vector<8x32xf32>
    %147 = vector.extract_strided_slice %145 {offsets = [0, 32], sizes = [8, 32], strides = [1, 1]} : vector<8x128xf32> to vector<8x32xf32>
    %148 = vector.extract_strided_slice %145 {offsets = [0, 64], sizes = [8, 32], strides = [1, 1]} : vector<8x128xf32> to vector<8x32xf32>
    %cst_44 = arith.constant 2.000000e+00 : f32
    %149 = vector.broadcast %cst_44 : f32 to vector<8x32xf32>
    %150 = arith.mulf %149, %148 : vector<8x32xf32>
    %cst_45 = arith.constant 1.000000e+00 : f32
    %151 = vector.broadcast %cst_45 : f32 to vector<8x32xf32>
    %152 = arith.subf %150, %151 : vector<8x32xf32>
    %153 = vector.extract_strided_slice %145 {offsets = [0, 96], sizes = [8, 32], strides = [1, 1]} : vector<8x128xf32> to vector<8x32xf32>
    %154 = arith.mulf %147, %111 : vector<8x32xf32>
    %155 = arith.mulf %146, %152 : vector<8x32xf32>
    %156 = arith.addf %154, %155 : vector<8x32xf32>
    %157 = math.tanh %156 : vector<8x32xf32>
    %158 = arith.mulf %153, %157 : vector<8x32xf32>
    %c32 = arith.constant 32 : index
    %c0_46 = arith.constant 0 : index
    %159 = vector.load %arg9[%c32, %c0_46] : memref<64x128xf32, #tpu.memory_space<vmem>>, vector<8x128xf32>
    %160 = arith.truncf %140 : vector<8x32xf32> to vector<8x32xbf16>
    %cst_47 = arith.constant dense<0.000000e+00> : vector<8x128xf32>
    %161 = tpu.matmul %160, %7, %cst_47 {dimension_numbers = #tpu.dot_dimension_numbers<[1], [0], [0], [1], [0, 0, 1, 1], [], []>} : vector<8x32xbf16>, vector<32x128xbf16>, vector<8x128xf32> -> vector<8x128xf32>
    %162 = arith.addf %159, %161 : vector<8x128xf32>
    %163 = tpu.concatenate %140, %158 in 1 : vector<8x32xf32>, vector<8x32xf32> -> vector<8x64xf32>
    %164 = arith.truncf %163 : vector<8x64xf32> to vector<8x64xbf16>
    %cst_48 = arith.constant dense<0.000000e+00> : vector<8x128xf32>
    %165 = tpu.matmul %164, %8, %cst_48 {dimension_numbers = #tpu.dot_dimension_numbers<[1], [0], [0], [1], [0, 0, 1, 1], [], []>} : vector<8x64xbf16>, vector<64x128xbf16>, vector<8x128xf32> -> vector<8x128xf32>
    %166 = vector.broadcast %9 : vector<1x128xf32> to vector<8x128xf32>
    %167 = arith.addf %165, %166 : vector<8x128xf32>
    %168 = arith.negf %162 : vector<8x128xf32>
    %169 = math.exp %168 : vector<8x128xf32>
    %cst_49 = arith.constant 1.000000e+00 : f32
    %170 = vector.broadcast %cst_49 : f32 to vector<8x128xf32>
    %171 = arith.addf %170, %169 : vector<8x128xf32>
    %172 = arith.divf %170, %171 : vector<8x128xf32>
    %173 = vector.extract_strided_slice %172 {offsets = [0, 0], sizes = [8, 32], strides = [1, 1]} : vector<8x128xf32> to vector<8x32xf32>
    %174 = vector.extract_strided_slice %172 {offsets = [0, 32], sizes = [8, 32], strides = [1, 1]} : vector<8x128xf32> to vector<8x32xf32>
    %175 = vector.extract_strided_slice %172 {offsets = [0, 64], sizes = [8, 32], strides = [1, 1]} : vector<8x128xf32> to vector<8x32xf32>
    %cst_50 = arith.constant 2.000000e+00 : f32
    %176 = vector.broadcast %cst_50 : f32 to vector<8x32xf32>
    %177 = arith.mulf %176, %175 : vector<8x32xf32>
    %cst_51 = arith.constant 1.000000e+00 : f32
    %178 = vector.broadcast %cst_51 : f32 to vector<8x32xf32>
    %179 = arith.subf %177, %178 : vector<8x32xf32>
    %180 = vector.extract_strided_slice %172 {offsets = [0, 96], sizes = [8, 32], strides = [1, 1]} : vector<8x128xf32> to vector<8x32xf32>
    %181 = arith.mulf %174, %138 : vector<8x32xf32>
    %182 = arith.mulf %173, %179 : vector<8x32xf32>
    %183 = arith.addf %181, %182 : vector<8x32xf32>
    %184 = math.tanh %183 : vector<8x32xf32>
    %185 = arith.mulf %180, %184 : vector<8x32xf32>
    %186 = arith.negf %167 : vector<8x128xf32>
    %187 = math.exp %186 : vector<8x128xf32>
    %cst_52 = arith.constant 1.000000e+00 : f32
    %188 = vector.broadcast %cst_52 : f32 to vector<8x128xf32>
    %189 = arith.addf %188, %187 : vector<8x128xf32>
    %190 = arith.divf %188, %189 : vector<8x128xf32>
    %191 = vector.extract_strided_slice %190 {offsets = [0, 0], sizes = [8, 32], strides = [1, 1]} : vector<8x128xf32> to vector<8x32xf32>
    %192 = vector.extract_strided_slice %190 {offsets = [0, 32], sizes = [8, 32], strides = [1, 1]} : vector<8x128xf32> to vector<8x32xf32>
    %193 = vector.extract_strided_slice %190 {offsets = [0, 64], sizes = [8, 32], strides = [1, 1]} : vector<8x128xf32> to vector<8x32xf32>
    %cst_53 = arith.constant 2.000000e+00 : f32
    %194 = vector.broadcast %cst_53 : f32 to vector<8x32xf32>
    %195 = arith.mulf %194, %193 : vector<8x32xf32>
    %cst_54 = arith.constant 1.000000e+00 : f32
    %196 = vector.broadcast %cst_54 : f32 to vector<8x32xf32>
    %197 = arith.subf %195, %196 : vector<8x32xf32>
    %198 = vector.extract_strided_slice %190 {offsets = [0, 96], sizes = [8, 32], strides = [1, 1]} : vector<8x128xf32> to vector<8x32xf32>
    %199 = arith.mulf %192, %156 : vector<8x32xf32>
    %200 = arith.mulf %191, %197 : vector<8x32xf32>
    %201 = arith.addf %199, %200 : vector<8x32xf32>
    %202 = math.tanh %201 : vector<8x32xf32>
    %203 = arith.mulf %198, %202 : vector<8x32xf32>
    %c40 = arith.constant 40 : index
    %c0_55 = arith.constant 0 : index
    %204 = vector.load %arg9[%c40, %c0_55] : memref<64x128xf32, #tpu.memory_space<vmem>>, vector<8x128xf32>
    %205 = arith.truncf %185 : vector<8x32xf32> to vector<8x32xbf16>
    %cst_56 = arith.constant dense<0.000000e+00> : vector<8x128xf32>
    %206 = tpu.matmul %205, %7, %cst_56 {dimension_numbers = #tpu.dot_dimension_numbers<[1], [0], [0], [1], [0, 0, 1, 1], [], []>} : vector<8x32xbf16>, vector<32x128xbf16>, vector<8x128xf32> -> vector<8x128xf32>
    %207 = arith.addf %204, %206 : vector<8x128xf32>
    %208 = tpu.concatenate %185, %203 in 1 : vector<8x32xf32>, vector<8x32xf32> -> vector<8x64xf32>
    %209 = arith.truncf %208 : vector<8x64xf32> to vector<8x64xbf16>
    %cst_57 = arith.constant dense<0.000000e+00> : vector<8x128xf32>
    %210 = tpu.matmul %209, %8, %cst_57 {dimension_numbers = #tpu.dot_dimension_numbers<[1], [0], [0], [1], [0, 0, 1, 1], [], []>} : vector<8x64xbf16>, vector<64x128xbf16>, vector<8x128xf32> -> vector<8x128xf32>
    %211 = vector.broadcast %9 : vector<1x128xf32> to vector<8x128xf32>
    %212 = arith.addf %210, %211 : vector<8x128xf32>
    %213 = arith.negf %207 : vector<8x128xf32>
    %214 = math.exp %213 : vector<8x128xf32>
    %cst_58 = arith.constant 1.000000e+00 : f32
    %215 = vector.broadcast %cst_58 : f32 to vector<8x128xf32>
    %216 = arith.addf %215, %214 : vector<8x128xf32>
    %217 = arith.divf %215, %216 : vector<8x128xf32>
    %218 = vector.extract_strided_slice %217 {offsets = [0, 0], sizes = [8, 32], strides = [1, 1]} : vector<8x128xf32> to vector<8x32xf32>
    %219 = vector.extract_strided_slice %217 {offsets = [0, 32], sizes = [8, 32], strides = [1, 1]} : vector<8x128xf32> to vector<8x32xf32>
    %220 = vector.extract_strided_slice %217 {offsets = [0, 64], sizes = [8, 32], strides = [1, 1]} : vector<8x128xf32> to vector<8x32xf32>
    %cst_59 = arith.constant 2.000000e+00 : f32
    %221 = vector.broadcast %cst_59 : f32 to vector<8x32xf32>
    %222 = arith.mulf %221, %220 : vector<8x32xf32>
    %cst_60 = arith.constant 1.000000e+00 : f32
    %223 = vector.broadcast %cst_60 : f32 to vector<8x32xf32>
    %224 = arith.subf %222, %223 : vector<8x32xf32>
    %225 = vector.extract_strided_slice %217 {offsets = [0, 96], sizes = [8, 32], strides = [1, 1]} : vector<8x128xf32> to vector<8x32xf32>
    %226 = arith.mulf %219, %183 : vector<8x32xf32>
    %227 = arith.mulf %218, %224 : vector<8x32xf32>
    %228 = arith.addf %226, %227 : vector<8x32xf32>
    %229 = math.tanh %228 : vector<8x32xf32>
    %230 = arith.mulf %225, %229 : vector<8x32xf32>
    %231 = arith.negf %212 : vector<8x128xf32>
    %232 = math.exp %231 : vector<8x128xf32>
    %cst_61 = arith.constant 1.000000e+00 : f32
    %233 = vector.broadcast %cst_61 : f32 to vector<8x128xf32>
    %234 = arith.addf %233, %232 : vector<8x128xf32>
    %235 = arith.divf %233, %234 : vector<8x128xf32>
    %236 = vector.extract_strided_slice %235 {offsets = [0, 0], sizes = [8, 32], strides = [1, 1]} : vector<8x128xf32> to vector<8x32xf32>
    %237 = vector.extract_strided_slice %235 {offsets = [0, 32], sizes = [8, 32], strides = [1, 1]} : vector<8x128xf32> to vector<8x32xf32>
    %238 = vector.extract_strided_slice %235 {offsets = [0, 64], sizes = [8, 32], strides = [1, 1]} : vector<8x128xf32> to vector<8x32xf32>
    %cst_62 = arith.constant 2.000000e+00 : f32
    %239 = vector.broadcast %cst_62 : f32 to vector<8x32xf32>
    %240 = arith.mulf %239, %238 : vector<8x32xf32>
    %cst_63 = arith.constant 1.000000e+00 : f32
    %241 = vector.broadcast %cst_63 : f32 to vector<8x32xf32>
    %242 = arith.subf %240, %241 : vector<8x32xf32>
    %243 = vector.extract_strided_slice %235 {offsets = [0, 96], sizes = [8, 32], strides = [1, 1]} : vector<8x128xf32> to vector<8x32xf32>
    %244 = arith.mulf %237, %201 : vector<8x32xf32>
    %245 = arith.mulf %236, %242 : vector<8x32xf32>
    %246 = arith.addf %244, %245 : vector<8x32xf32>
    %247 = math.tanh %246 : vector<8x32xf32>
    %248 = arith.mulf %243, %247 : vector<8x32xf32>
    %c48 = arith.constant 48 : index
    %c0_64 = arith.constant 0 : index
    %249 = vector.load %arg9[%c48, %c0_64] : memref<64x128xf32, #tpu.memory_space<vmem>>, vector<8x128xf32>
    %250 = arith.truncf %230 : vector<8x32xf32> to vector<8x32xbf16>
    %cst_65 = arith.constant dense<0.000000e+00> : vector<8x128xf32>
    %251 = tpu.matmul %250, %7, %cst_65 {dimension_numbers = #tpu.dot_dimension_numbers<[1], [0], [0], [1], [0, 0, 1, 1], [], []>} : vector<8x32xbf16>, vector<32x128xbf16>, vector<8x128xf32> -> vector<8x128xf32>
    %252 = arith.addf %249, %251 : vector<8x128xf32>
    %253 = tpu.concatenate %230, %248 in 1 : vector<8x32xf32>, vector<8x32xf32> -> vector<8x64xf32>
    %254 = arith.truncf %253 : vector<8x64xf32> to vector<8x64xbf16>
    %cst_66 = arith.constant dense<0.000000e+00> : vector<8x128xf32>
    %255 = tpu.matmul %254, %8, %cst_66 {dimension_numbers = #tpu.dot_dimension_numbers<[1], [0], [0], [1], [0, 0, 1, 1], [], []>} : vector<8x64xbf16>, vector<64x128xbf16>, vector<8x128xf32> -> vector<8x128xf32>
    %256 = vector.broadcast %9 : vector<1x128xf32> to vector<8x128xf32>
    %257 = arith.addf %255, %256 : vector<8x128xf32>
    %258 = arith.negf %252 : vector<8x128xf32>
    %259 = math.exp %258 : vector<8x128xf32>
    %cst_67 = arith.constant 1.000000e+00 : f32
    %260 = vector.broadcast %cst_67 : f32 to vector<8x128xf32>
    %261 = arith.addf %260, %259 : vector<8x128xf32>
    %262 = arith.divf %260, %261 : vector<8x128xf32>
    %263 = vector.extract_strided_slice %262 {offsets = [0, 0], sizes = [8, 32], strides = [1, 1]} : vector<8x128xf32> to vector<8x32xf32>
    %264 = vector.extract_strided_slice %262 {offsets = [0, 32], sizes = [8, 32], strides = [1, 1]} : vector<8x128xf32> to vector<8x32xf32>
    %265 = vector.extract_strided_slice %262 {offsets = [0, 64], sizes = [8, 32], strides = [1, 1]} : vector<8x128xf32> to vector<8x32xf32>
    %cst_68 = arith.constant 2.000000e+00 : f32
    %266 = vector.broadcast %cst_68 : f32 to vector<8x32xf32>
    %267 = arith.mulf %266, %265 : vector<8x32xf32>
    %cst_69 = arith.constant 1.000000e+00 : f32
    %268 = vector.broadcast %cst_69 : f32 to vector<8x32xf32>
    %269 = arith.subf %267, %268 : vector<8x32xf32>
    %270 = vector.extract_strided_slice %262 {offsets = [0, 96], sizes = [8, 32], strides = [1, 1]} : vector<8x128xf32> to vector<8x32xf32>
    %271 = arith.mulf %264, %228 : vector<8x32xf32>
    %272 = arith.mulf %263, %269 : vector<8x32xf32>
    %273 = arith.addf %271, %272 : vector<8x32xf32>
    %274 = math.tanh %273 : vector<8x32xf32>
    %275 = arith.mulf %270, %274 : vector<8x32xf32>
    %276 = arith.negf %257 : vector<8x128xf32>
    %277 = math.exp %276 : vector<8x128xf32>
    %cst_70 = arith.constant 1.000000e+00 : f32
    %278 = vector.broadcast %cst_70 : f32 to vector<8x128xf32>
    %279 = arith.addf %278, %277 : vector<8x128xf32>
    %280 = arith.divf %278, %279 : vector<8x128xf32>
    %281 = vector.extract_strided_slice %280 {offsets = [0, 0], sizes = [8, 32], strides = [1, 1]} : vector<8x128xf32> to vector<8x32xf32>
    %282 = vector.extract_strided_slice %280 {offsets = [0, 32], sizes = [8, 32], strides = [1, 1]} : vector<8x128xf32> to vector<8x32xf32>
    %283 = vector.extract_strided_slice %280 {offsets = [0, 64], sizes = [8, 32], strides = [1, 1]} : vector<8x128xf32> to vector<8x32xf32>
    %cst_71 = arith.constant 2.000000e+00 : f32
    %284 = vector.broadcast %cst_71 : f32 to vector<8x32xf32>
    %285 = arith.mulf %284, %283 : vector<8x32xf32>
    %cst_72 = arith.constant 1.000000e+00 : f32
    %286 = vector.broadcast %cst_72 : f32 to vector<8x32xf32>
    %287 = arith.subf %285, %286 : vector<8x32xf32>
    %288 = vector.extract_strided_slice %280 {offsets = [0, 96], sizes = [8, 32], strides = [1, 1]} : vector<8x128xf32> to vector<8x32xf32>
    %289 = arith.mulf %282, %246 : vector<8x32xf32>
    %290 = arith.mulf %281, %287 : vector<8x32xf32>
    %291 = arith.addf %289, %290 : vector<8x32xf32>
    %292 = math.tanh %291 : vector<8x32xf32>
    %293 = arith.mulf %288, %292 : vector<8x32xf32>
    %c56 = arith.constant 56 : index
    %c0_73 = arith.constant 0 : index
    %294 = vector.load %arg9[%c56, %c0_73] : memref<64x128xf32, #tpu.memory_space<vmem>>, vector<8x128xf32>
    %295 = arith.truncf %275 : vector<8x32xf32> to vector<8x32xbf16>
    %cst_74 = arith.constant dense<0.000000e+00> : vector<8x128xf32>
    %296 = tpu.matmul %295, %7, %cst_74 {dimension_numbers = #tpu.dot_dimension_numbers<[1], [0], [0], [1], [0, 0, 1, 1], [], []>} : vector<8x32xbf16>, vector<32x128xbf16>, vector<8x128xf32> -> vector<8x128xf32>
    %297 = arith.addf %294, %296 : vector<8x128xf32>
    %298 = tpu.concatenate %275, %293 in 1 : vector<8x32xf32>, vector<8x32xf32> -> vector<8x64xf32>
    %299 = arith.truncf %298 : vector<8x64xf32> to vector<8x64xbf16>
    %cst_75 = arith.constant dense<0.000000e+00> : vector<8x128xf32>
    %300 = tpu.matmul %299, %8, %cst_75 {dimension_numbers = #tpu.dot_dimension_numbers<[1], [0], [0], [1], [0, 0, 1, 1], [], []>} : vector<8x64xbf16>, vector<64x128xbf16>, vector<8x128xf32> -> vector<8x128xf32>
    %301 = vector.broadcast %9 : vector<1x128xf32> to vector<8x128xf32>
    %302 = arith.addf %300, %301 : vector<8x128xf32>
    %303 = arith.negf %297 : vector<8x128xf32>
    %304 = math.exp %303 : vector<8x128xf32>
    %cst_76 = arith.constant 1.000000e+00 : f32
    %305 = vector.broadcast %cst_76 : f32 to vector<8x128xf32>
    %306 = arith.addf %305, %304 : vector<8x128xf32>
    %307 = arith.divf %305, %306 : vector<8x128xf32>
    %308 = vector.extract_strided_slice %307 {offsets = [0, 0], sizes = [8, 32], strides = [1, 1]} : vector<8x128xf32> to vector<8x32xf32>
    %309 = vector.extract_strided_slice %307 {offsets = [0, 32], sizes = [8, 32], strides = [1, 1]} : vector<8x128xf32> to vector<8x32xf32>
    %310 = vector.extract_strided_slice %307 {offsets = [0, 64], sizes = [8, 32], strides = [1, 1]} : vector<8x128xf32> to vector<8x32xf32>
    %cst_77 = arith.constant 2.000000e+00 : f32
    %311 = vector.broadcast %cst_77 : f32 to vector<8x32xf32>
    %312 = arith.mulf %311, %310 : vector<8x32xf32>
    %cst_78 = arith.constant 1.000000e+00 : f32
    %313 = vector.broadcast %cst_78 : f32 to vector<8x32xf32>
    %314 = arith.subf %312, %313 : vector<8x32xf32>
    %315 = vector.extract_strided_slice %307 {offsets = [0, 96], sizes = [8, 32], strides = [1, 1]} : vector<8x128xf32> to vector<8x32xf32>
    %316 = arith.mulf %309, %273 : vector<8x32xf32>
    %317 = arith.mulf %308, %314 : vector<8x32xf32>
    %318 = arith.addf %316, %317 : vector<8x32xf32>
    %319 = math.tanh %318 : vector<8x32xf32>
    %320 = arith.mulf %315, %319 : vector<8x32xf32>
    %321 = arith.negf %302 : vector<8x128xf32>
    %322 = math.exp %321 : vector<8x128xf32>
    %cst_79 = arith.constant 1.000000e+00 : f32
    %323 = vector.broadcast %cst_79 : f32 to vector<8x128xf32>
    %324 = arith.addf %323, %322 : vector<8x128xf32>
    %325 = arith.divf %323, %324 : vector<8x128xf32>
    %326 = vector.extract_strided_slice %325 {offsets = [0, 0], sizes = [8, 32], strides = [1, 1]} : vector<8x128xf32> to vector<8x32xf32>
    %327 = vector.extract_strided_slice %325 {offsets = [0, 32], sizes = [8, 32], strides = [1, 1]} : vector<8x128xf32> to vector<8x32xf32>
    %328 = vector.extract_strided_slice %325 {offsets = [0, 64], sizes = [8, 32], strides = [1, 1]} : vector<8x128xf32> to vector<8x32xf32>
    %cst_80 = arith.constant 2.000000e+00 : f32
    %329 = vector.broadcast %cst_80 : f32 to vector<8x32xf32>
    %330 = arith.mulf %329, %328 : vector<8x32xf32>
    %cst_81 = arith.constant 1.000000e+00 : f32
    %331 = vector.broadcast %cst_81 : f32 to vector<8x32xf32>
    %332 = arith.subf %330, %331 : vector<8x32xf32>
    %333 = vector.extract_strided_slice %325 {offsets = [0, 96], sizes = [8, 32], strides = [1, 1]} : vector<8x128xf32> to vector<8x32xf32>
    %334 = arith.mulf %327, %291 : vector<8x32xf32>
    %335 = arith.mulf %326, %332 : vector<8x32xf32>
    %336 = arith.addf %334, %335 : vector<8x32xf32>
    %337 = math.tanh %336 : vector<8x32xf32>
    %338 = arith.mulf %333, %337 : vector<8x32xf32>
    %339 = tpu.concatenate %320, %338 in 1 : vector<8x32xf32>, vector<8x32xf32> -> vector<8x64xf32>
    %340 = arith.truncf %339 : vector<8x64xf32> to vector<8x64xbf16>
    %cst_82 = arith.constant dense<0.000000e+00> : vector<8x128xf32>
    %341 = tpu.matmul %340, %8, %cst_82 {dimension_numbers = #tpu.dot_dimension_numbers<[1], [0], [0], [1], [0, 0, 1, 1], [], []>} : vector<8x64xbf16>, vector<64x128xbf16>, vector<8x128xf32> -> vector<8x128xf32>
    %342 = vector.broadcast %9 : vector<1x128xf32> to vector<8x128xf32>
    %343 = arith.addf %341, %342 : vector<8x128xf32>
    %344 = arith.negf %343 : vector<8x128xf32>
    %345 = math.exp %344 : vector<8x128xf32>
    %cst_83 = arith.constant 1.000000e+00 : f32
    %346 = vector.broadcast %cst_83 : f32 to vector<8x128xf32>
    %347 = arith.addf %346, %345 : vector<8x128xf32>
    %348 = arith.divf %346, %347 : vector<8x128xf32>
    %349 = vector.extract_strided_slice %348 {offsets = [0, 0], sizes = [8, 32], strides = [1, 1]} : vector<8x128xf32> to vector<8x32xf32>
    %350 = vector.extract_strided_slice %348 {offsets = [0, 32], sizes = [8, 32], strides = [1, 1]} : vector<8x128xf32> to vector<8x32xf32>
    %351 = vector.extract_strided_slice %348 {offsets = [0, 64], sizes = [8, 32], strides = [1, 1]} : vector<8x128xf32> to vector<8x32xf32>
    %cst_84 = arith.constant 2.000000e+00 : f32
    %352 = vector.broadcast %cst_84 : f32 to vector<8x32xf32>
    %353 = arith.mulf %352, %351 : vector<8x32xf32>
    %cst_85 = arith.constant 1.000000e+00 : f32
    %354 = vector.broadcast %cst_85 : f32 to vector<8x32xf32>
    %355 = arith.subf %353, %354 : vector<8x32xf32>
    %356 = vector.extract_strided_slice %348 {offsets = [0, 96], sizes = [8, 32], strides = [1, 1]} : vector<8x128xf32> to vector<8x32xf32>
    %357 = arith.mulf %350, %336 : vector<8x32xf32>
    %358 = arith.mulf %349, %355 : vector<8x32xf32>
    %359 = arith.addf %357, %358 : vector<8x32xf32>
    %360 = math.tanh %359 : vector<8x32xf32>
    %361 = arith.mulf %356, %360 : vector<8x32xf32>
    %362 = arith.truncf %361 : vector<8x32xf32> to vector<8x32xbf16>
    %c0_86 = arith.constant 0 : index
    %c0_87 = arith.constant 0 : index
    %363 = vector.load %arg6[%c0_86, %c0_87] : memref<32x128xbf16, #tpu.memory_space<vmem>>, vector<32x128xbf16>
    %cst_88 = arith.constant dense<0.000000e+00> : vector<8x128xf32>
    %364 = tpu.matmul %362, %363, %cst_88 {dimension_numbers = #tpu.dot_dimension_numbers<[1], [0], [0], [1], [0, 0, 1, 1], [], []>} : vector<8x32xbf16>, vector<32x128xbf16>, vector<8x128xf32> -> vector<8x128xf32>
    %c0_89 = arith.constant 0 : index
    %c0_90 = arith.constant 0 : index
    %365 = vector.load %arg7[%c0_89, %c0_90] : memref<1x128xf32, #tpu.memory_space<vmem>>, vector<1x128xf32>
    %366 = vector.broadcast %365 : vector<1x128xf32> to vector<8x128xf32>
    %367 = arith.addf %364, %366 : vector<8x128xf32>
    %c0_91 = arith.constant 0 : index
    %c0_92 = arith.constant 0 : index
    %368 = vector.load %arg8[%c0_91, %c0_92] : memref<8x128xf32, #tpu.memory_space<vmem>>, vector<8x128xf32>
    tpu.vector_store %arg8[%c0_91, %c0_92], %367 {strides = array<i32>} : memref<8x128xf32, #tpu.memory_space<vmem>>, vector<8x128xf32>,
    return
  }
}

</mosaic_0001>

<llo_original>
// kernel: tpu_custom_call.1
$region0: #{tpu_custom_call.1}
  #allocation0 [shape = 'u32[]', space=smem, size = 0x4, offset = 0x4, fixed_abs, tag = 'smem constant byte address 0x4 - core index']
  #allocation1 [shape = 'u32[144,128]{1,0:T(1,128)}', space=vmem, size = 0x12000, scoped, tag = 'internal scratch']
  #allocation2 [shape = 'f32[64,128]{1,0:T(8,128)}', space=vmem, size = 0x8000, scoped, tag = 'scratch operand']
  %s0 = inlined_call_operand.vmem [shape: bf16[64,4], index: 0, kind: input, shape index: {}]
  %s1 = inlined_call_operand.hbm [shape: bf16[4,128], index: 1, kind: input, shape index: {}]
  %s2 = inlined_call_operand.vmem [shape: bf16[32,128], index: 2, kind: input, shape index: {}]
  %s3 = inlined_call_operand.vmem [shape: f32[1,128], index: 3, kind: input, shape index: {}]
  %s4 = inlined_call_operand.vmem [shape: bf16[64,128], index: 4, kind: input, shape index: {}]
  %s5 = inlined_call_operand.vmem [shape: f32[1,128], index: 5, kind: input, shape index: {}]
  %s6 = inlined_call_operand.hbm [shape: bf16[32,128], index: 6, kind: input, shape index: {}]
  %s7 = inlined_call_operand.vmem [shape: f32[1,128], index: 7, kind: input, shape index: {}]
  %s8 = inlined_call_operand.hbm [shape: f32[8,128], index: 8, kind: output, shape index: {}]
  %s9 = sld [smem:[#allocation0]]
  $region50: #{tpu_custom_call.1} parent=0
    _
  %s11 = ssub.s32 1, %s9
  %s12 = scalar_select 0, %s11, %s9
  $region1: #{tpu_custom_call.1} parent=0
    #allocation3 [shape = 'u8[1024]{0}', space=vmem, size = 0x400, scoped, tag = 'input window, operand 1, single buffered']
    #allocation4 [shape = 's32[1]{0}', space=sflag, size = 0x4, scoped, tag = 'scoped memory for tpu_custom_call.1']
    #allocation5 [shape = 's32[1]{0}', space=sflag, size = 0x4, scoped, tag = 'scoped memory for tpu_custom_call.1']
    #allocation6 [shape = 'u8[8192]{0}', space=vmem, size = 0x2000, scoped, tag = 'input window, operand 6, single buffered']
    #allocation7 [shape = 's32[1]{0}', space=sflag, size = 0x4, scoped, tag = 'scoped memory for tpu_custom_call.1']
    #allocation8 [shape = 'u8[4096]{0}', space=vmem, size = 0x1000, scoped, tag = 'output window, operand 0, single buffered']
    %13 = vsyncpa [#allocation4], 0
    %14 = vsyncpa [#allocation7], 0
    %15 = vsyncpa [#allocation5], 0
    // Predicated region
    $region2: #{tpu_custom_call.1} parent=1 // pred_check
      _
    $region3: #{tpu_custom_call.1} parent=1 // pred_check_branch
      %17 = sbr.rel (0) target = $region5
    $region4: #{tpu_custom_call.1} parent=1 // pred_region
      _
    $region5: #{tpu_custom_call.1} parent=1 // pred_fallthru
      _
    // Predicated region
    $region6: #{tpu_custom_call.1} parent=1 // pred_check
      _
    $region7: #{tpu_custom_call.1} parent=1 // pred_check_branch
      %19 = sbr.rel (0) target = $region9
    $region8: #{tpu_custom_call.1} parent=1 // pred_region
      %s21 = ssub.s32 32, 32
      %22 = vsyncadd [#allocation4], %s21
      %s24 = sshll.u32 [#allocation3], 4
      %s25 = int_to_ptr.vmem [resolvable:$true] %s24
      %27 = dma.hbm_to_vmem [thread:$0]  %s1, 32, %s25, [#allocation4]
    $region9: #{tpu_custom_call.1} parent=1 // pred_fallthru
      _
    // Predicated region
    $region10: #{tpu_custom_call.1} parent=1 // pred_check
      _
    $region11: #{tpu_custom_call.1} parent=1 // pred_check_branch
      %29 = sbr.rel (0) target = $region13
    $region12: #{tpu_custom_call.1} parent=1 // pred_region
      _
    $region13: #{tpu_custom_call.1} parent=1 // pred_fallthru
      _
    // Predicated region
    $region14: #{tpu_custom_call.1} parent=1 // pred_check
      _
    $region15: #{tpu_custom_call.1} parent=1 // pred_check_branch
      %31 = sbr.rel (0) target = $region17
    $region16: #{tpu_custom_call.1} parent=1 // pred_region
      _
    $region17: #{tpu_custom_call.1} parent=1 // pred_fallthru
      _
    // Predicated region
    $region18: #{tpu_custom_call.1} parent=1 // pred_check
      _
    $region19: #{tpu_custom_call.1} parent=1 // pred_check_branch
      %33 = sbr.rel (0) target = $region21
    $region20: #{tpu_custom_call.1} parent=1 // pred_region
      _
    $region21: #{tpu_custom_call.1} parent=1 // pred_fallthru
      _
    // Predicated region
    $region22: #{tpu_custom_call.1} parent=1 // pred_check
      _
    $region23: #{tpu_custom_call.1} parent=1 // pred_check_branch
      %35 = sbr.rel (0) target = $region25
    $region24: #{tpu_custom_call.1} parent=1 // pred_region
      _
    $region25: #{tpu_custom_call.1} parent=1 // pred_fallthru
      _
    // Predicated region
    $region26: #{tpu_custom_call.1} parent=1 // pred_check
      _
    $region27: #{tpu_custom_call.1} parent=1 // pred_check_branch
      %37 = sbr.rel (0) target = $region29
    $region28: #{tpu_custom_call.1} parent=1 // pred_region
      %s39 = ssub.s32 256, 256
      %40 = vsyncadd [#allocation7], %s39
      %s41 = sshll.u32 [#allocation6], 4
      %s42 = int_to_ptr.vmem [resolvable:$true] %s41
      %47 = dma.hbm_to_vmem [thread:$0]  %s6, 256, %s42, [#allocation7], 64, 64, 4
    $region29: #{tpu_custom_call.1} parent=1 // pred_fallthru
      _
    // Predicated region
    $region30: #{tpu_custom_call.1} parent=1 // pred_check
      _
    $region31: #{tpu_custom_call.1} parent=1 // pred_check_branch
      %49 = sbr.rel (0) target = $region33
    $region32: #{tpu_custom_call.1} parent=1 // pred_region
      _
    $region33: #{tpu_custom_call.1} parent=1 // pred_fallthru
      _
    // Predicated region
    $region34: #{tpu_custom_call.1} parent=1 // pred_check
      _
    $region35: #{tpu_custom_call.1} parent=1 // pred_check_branch
      %51 = sbr.rel (0) target = $region37
    $region36: #{tpu_custom_call.1} parent=1 // pred_region
      %52 = dma.done [#allocation4], 32
    $region37: #{tpu_custom_call.1} parent=1 // pred_fallthru
      _
    // Predicated region
    $region38: #{tpu_custom_call.1} parent=1 // pred_check
      _
    $region39: #{tpu_custom_call.1} parent=1 // pred_check_branch
      %54 = sbr.rel (0) target = $region41
    $region40: #{tpu_custom_call.1} parent=1 // pred_region
      %55 = dma.done [#allocation7], 256
    $region41: #{tpu_custom_call.1} parent=1 // pred_fallthru
      _
    %v57 = vld [vmem:[%s0] sm:$0xf]
    %v58 = vld [vmem:[%s0 + $0x4] sm:$0xf]
    %v59 = vld [vmem:[%s0 + $0x8] sm:$0xf]
    %v60 = vld [vmem:[%s0 + $0xc] sm:$0xf]
    %v61 = vld [vmem:[%s0 + $0x10] sm:$0xf]
    %v62 = vld [vmem:[%s0 + $0x14] sm:$0xf]
    %v63 = vld [vmem:[%s0 + $0x18] sm:$0xf]
    %v64 = vld [vmem:[%s0 + $0x1c] sm:$0xf]
    %v65 = vld [vmem:[#allocation3] sm:$0x3]
    %v66 = vld [vmem:[%s3] sm:$0x1]
    %v68 = vlaneseq
    %v69 = vshrl.u32 %v68, 7
    %v70 = vsub.s32 0, %v69
    %v71 = vrot.slane %v66, %v70
    %v81 = vunpack.c.l.b16 %v57
    %v82 = vunpack.c.l.b16 %v58
    %v83 = vunpack.c.l.b16 %v59
    %v84 = vunpack.c.l.b16 %v60
    %v85 = vunpack.c.l.b16 %v61
    %v86 = vunpack.c.l.b16 %v62
    %v87 = vunpack.c.l.b16 %v63
    %v88 = vunpack.c.l.b16 %v64
    %v89 = vpack.c.b16 %v82, %v81
    %v90 = vpack.c.b16 %v84, %v83
    %v91 = vpack.c.b16 %v86, %v85
    %v92 = vpack.c.b16 %v88, %v87
    %vm93 = vcmask 31744
    %v95 = vsel %vm93, %v89, 0
    %v98 = vsel %vm93, %v90, 0
    %v101 = vsel %vm93, %v91, 0
    %v104 = vsel %vm93, %v92, 0
    %vm106 = vcmask 1041408
    %v108 = vsel %vm106, %v65, 0
    %110 = vmatprep.subr.bf16.mxu0 0
    %111 = vmatpush1.bf16.msra.mxu0 %v108
    %112 = vmatprep.subr.bf16.mxu0 0
    %113 = vmatpush1.bf16.msra.mxu0 0
    %114 = vmatprep.subr.bf16.mxu0 0
    %115 = vmatpush1.bf16.msra.mxu0 0
    %116 = vmatprep.subr.bf16.mxu0 0
    %117 = vmatpush1.bf16.msra.mxu0 0
    %118 = vmatprep.subr.bf16.mxu0 0
    %119 = vmatpush1.bf16.msra.mxu0 0
    %120 = vmatprep.subr.bf16.mxu0 0
    %121 = vmatpush1.bf16.msra.mxu0 0
    %122 = vmatprep.subr.bf16.mxu0 0
    %123 = vmatpush1.bf16.msra.mxu0 0
    %124 = vmatprep.subr.bf16.mxu0 0
    %125 = vmatpush1.bf16.msra.mxu0 0
    %126 = vmatprep.subr.bf16.mxu0 0
    %127 = vmatpush1.bf16.msra.mxu0 0
    %128 = vmatprep.subr.bf16.mxu0 0
    %129 = vmatpush1.bf16.msra.mxu0 0
    %130 = vmatprep.subr.bf16.mxu0 0
    %131 = vmatpush1.bf16.msra.mxu0 0
    %132 = vmatprep.subr.bf16.mxu0 0
    %133 = vmatpush1.bf16.msra.mxu0 0
    %134 = vmatprep.subr.bf16.mxu0 0
    %135 = vmatpush1.bf16.msra.mxu0 0
    %136 = vmatprep.subr.bf16.mxu0 0
    %137 = vmatpush1.bf16.msra.mxu0 0
    %138 = vmatprep.subr.bf16.mxu0 0
    %139 = vmatpush1.bf16.msra.mxu0 0
    %140 = vmatprep.subr.bf16.mxu0 0
    %141 = vmatpush1.bf16.msra.mxu0 0
    %142 = vmatprep.mubr.bf16.mxu0 0
    %143 = vmatmul.mubr.bf16.gmra.mrb[0].mxu0 %v95
    %v144 = vpop.f32.mrb[0].mxu0
    %v145 = vadd.f32 %v71, %v144
    %v146 = vpop.f32.mrb[0].mxu0
    %v147 = vpop.f32.mrb[0].mxu0
    %v148 = vadd.f32 %v71, %v147
    %v149 = vpop.f32.mrb[0].mxu0
    %150 = vmatprep.mubr.bf16.mxu0 0
    %151 = vmatmul.mubr.bf16.gmra.mrb[0].mxu0 %v98
    %v152 = vpop.f32.mrb[0].mxu0
    %v153 = vadd.f32 %v71, %v152
    %v154 = vpop.f32.mrb[0].mxu0
    %v155 = vpop.f32.mrb[0].mxu0
    %v156 = vadd.f32 %v71, %v155
    %v157 = vpop.f32.mrb[0].mxu0
    %158 = vmatprep.mubr.bf16.mxu0 0
    %159 = vmatmul.mubr.bf16.gmra.mrb[0].mxu0 %v101
    %v160 = vpop.f32.mrb[0].mxu0
    %v161 = vadd.f32 %v71, %v160
    %v162 = vpop.f32.mrb[0].mxu0
    %v163 = vpop.f32.mrb[0].mxu0
    %v164 = vadd.f32 %v71, %v163
    %v165 = vpop.f32.mrb[0].mxu0
    %166 = vmatprep.mubr.bf16.mxu0 0
    %167 = vmatmul.mubr.bf16.gmra.mrb[0].mxu0 %v104
    %v168 = vpop.f32.mrb[0].mxu0
    %v169 = vadd.f32 %v71, %v168
    %v170 = vpop.f32.mrb[0].mxu0
    %v171 = vpop.f32.mrb[0].mxu0
    %v172 = vadd.f32 %v71, %v171
    %v173 = vpop.f32.mrb[0].mxu0
    %174 = vdwg.mxu0
    %175 = vst [vmem:[#allocation2] sm:$0xff] %v145
    %176 = vst [vmem:[#allocation2 + $0x8] sm:$0xff] %v148
    %177 = vst [vmem:[#allocation2 + $0x10] sm:$0xff] %v153
    %178 = vst [vmem:[#allocation2 + $0x18] sm:$0xff] %v156
    %179 = vst [vmem:[#allocation2 + $0x20] sm:$0xff] %v161
    %180 = vst [vmem:[#allocation2 + $0x28] sm:$0xff] %v164
    %181 = vst [vmem:[#allocation2 + $0x30] sm:$0xff] %v169
    %182 = vst [vmem:[#allocation2 + $0x38] sm:$0xff] %v172
    %v183 = vld [vmem:[%s2] sm:$0xf]
    %v184 = vld [vmem:[%s2 + $0x4] sm:$0xf]
    %v185 = vld [vmem:[%s2 + $0x8] sm:$0xf]
    %v186 = vld [vmem:[%s2 + $0xc] sm:$0xf]
    %v187 = vld [vmem:[%s4] sm:$0xf]
    %v188 = vld [vmem:[%s4 + $0x4] sm:$0xf]
    %v189 = vld [vmem:[%s4 + $0x8] sm:$0xf]
    %v190 = vld [vmem:[%s4 + $0xc] sm:$0xf]
    %v191 = vld [vmem:[%s4 + $0x10] sm:$0xf]
    %v192 = vld [vmem:[%s4 + $0x14] sm:$0xf]
    %v193 = vld [vmem:[%s4 + $0x18] sm:$0xf]
    %v194 = vld [vmem:[%s4 + $0x1c] sm:$0xf]
    %v195 = vld [vmem:[%s5] sm:$0x1]
    %v196 = vld [vmem:[#allocation2] sm:$0xff]
    %v197 = vxor.u32 %v196, 2147483648
    %v198 = vmul.f32 %v197, 1.442695
    %v199 = vpow.pop %v198
    %v200 = vadd.f32 %v199, 1.0
    %v201 = vrcp.pop %v200
    %v202 = vmul.f32 1.0, %v201
    %v203 = vmul.f32 %v202, 2.0
    %v204 = vsub.f32 %v203, 1.0
    %206 = vrot.lane.b32.xlu0 %v204, 64
    %v207 = vpop.permute.xlu0 %206
    %v209 = vmul.f32 %v202, %v207
    %v210 = vtanh.pop %v209
    %212 = vrot.lane.b32.xlu0 %v210, 96
    %v213 = vpop.permute.xlu0 %212
    %v215 = vmul.f32 %v202, %v213
    %v216 = vld [vmem:[#allocation2 + $0x8] sm:$0xff]
    %v217 = vpack.c.bf16 %v215, %v215
    %219 = vrot.lane.b32.xlu0 %v217, 32
    %v220 = vpop.permute.xlu0 %219
    %v225 = vunpack.c.l.b16 %v183
    %v226 = vunpack.c.l.b16 %v184
    %v227 = vunpack.c.l.b16 %v185
    %v228 = vunpack.c.l.b16 %v186
    %v229 = vpack.c.b16 %v226, %v225
    %v230 = vpack.c.b16 %v228, %v227
    %vm233 = vcmask 261120
    %v235 = vsel %vm233, %v220, 0
    %237 = vmatprep.subr.bf16.mxu0 0
    %238 = vmatpush1.bf16.msra.mxu0 %v229
    %239 = vmatprep.subr.bf16.mxu0 0
    %240 = vmatpush1.bf16.msra.mxu0 %v230
    %241 = vmatprep.subr.bf16.mxu0 0
    %242 = vmatpush1.bf16.msra.mxu0 0
    %243 = vmatprep.subr.bf16.mxu0 0
    %244 = vmatpush1.bf16.msra.mxu0 0
    %245 = vmatprep.subr.bf16.mxu0 0
    %246 = vmatpush1.bf16.msra.mxu0 0
    %247 = vmatprep.subr.bf16.mxu0 0
    %248 = vmatpush1.bf16.msra.mxu0 0
    %249 = vmatprep.subr.bf16.mxu0 0
    %250 = vmatpush1.bf16.msra.mxu0 0
    %251 = vmatprep.subr.bf16.mxu0 0
    %252 = vmatpush1.bf16.msra.mxu0 0
    %253 = vmatprep.subr.bf16.mxu0 0
    %254 = vmatpush1.bf16.msra.mxu0 0
    %255 = vmatprep.subr.bf16.mxu0 0
    %256 = vmatpush1.bf16.msra.mxu0 0
    %257 = vmatprep.subr.bf16.mxu0 0
    %258 = vmatpush1.bf16.msra.mxu0 0
    %259 = vmatprep.subr.bf16.mxu0 0
    %260 = vmatpush1.bf16.msra.mxu0 0
    %261 = vmatprep.subr.bf16.mxu0 0
    %262 = vmatpush1.bf16.msra.mxu0 0
    %263 = vmatprep.subr.bf16.mxu0 0
    %264 = vmatpush1.bf16.msra.mxu0 0
    %265 = vmatprep.subr.bf16.mxu0 0
    %266 = vmatpush1.bf16.msra.mxu0 0
    %267 = vmatprep.subr.bf16.mxu0 0
    %268 = vmatpush1.bf16.msra.mxu0 0
    %269 = vmatprep.mubr.bf16.mxu0 0
    %270 = vmatmul.mubr.bf16.gmra.mrb[0].mxu0 %v235
    %v271 = vpop.f32.mrb[0].mxu0
    %v272 = vadd.f32 0.0, %v271
    %v273 = vpop.f32.mrb[0].mxu0
    %v274 = vpop.f32.mrb[0].mxu0
    %v275 = vpop.f32.mrb[0].mxu0
    %276 = vdwg.mxu0
    %v277 = vadd.f32 %v216, %v272
    %279 = vrot.lane.b32.xlu0 %v215, 32
    %v280 = vpop.permute.xlu0 %279
    %v282 = vsel %vm233, %v280, 0.0
    %v283 = vpack.c.bf16 %v282, %v282
    %v285 = vlaneseq
    %v286 = vshrl.u32 %v285, 7
    %v287 = vsub.s32 0, %v286
    %v288 = vrot.slane %v195, %v287
    %v298 = vunpack.c.l.b16 %v187
    %v299 = vunpack.c.l.b16 %v188
    %v300 = vunpack.c.l.b16 %v189
    %v301 = vunpack.c.l.b16 %v190
    %v302 = vunpack.c.l.b16 %v191
    %v303 = vunpack.c.l.b16 %v192
    %v304 = vunpack.c.l.b16 %v193
    %v305 = vunpack.c.l.b16 %v194
    %v306 = vpack.c.b16 %v299, %v298
    %v307 = vpack.c.b16 %v301, %v300
    %v308 = vpack.c.b16 %v303, %v302
    %v309 = vpack.c.b16 %v305, %v304
    %vm314 = vcmask 523264
    %v316 = vsel %vm314, %v283, 0
    %318 = vmatprep.subr.bf16.mxu0 0
    %319 = vmatpush1.bf16.msra.mxu0 %v306
    %320 = vmatprep.subr.bf16.mxu0 0
    %321 = vmatpush1.bf16.msra.mxu0 %v307
    %322 = vmatprep.subr.bf16.mxu0 0
    %323 = vmatpush1.bf16.msra.mxu0 %v308
    %324 = vmatprep.subr.bf16.mxu0 0
    %325 = vmatpush1.bf16.msra.mxu0 %v309
    %326 = vmatprep.subr.bf16.mxu0 0
    %327 = vmatpush1.bf16.msra.mxu0 0
    %328 = vmatprep.subr.bf16.mxu0 0
    %329 = vmatpush1.bf16.msra.mxu0 0
    %330 = vmatprep.subr.bf16.mxu0 0
    %331 = vmatpush1.bf16.msra.mxu0 0
    %332 = vmatprep.subr.bf16.mxu0 0
    %333 = vmatpush1.bf16.msra.mxu0 0
    %334 = vmatprep.subr.bf16.mxu0 0
    %335 = vmatpush1.bf16.msra.mxu0 0
    %336 = vmatprep.subr.bf16.mxu0 0
    %337 = vmatpush1.bf16.msra.mxu0 0
    %338 = vmatprep.subr.bf16.mxu0 0
    %339 = vmatpush1.bf16.msra.mxu0 0
    %340 = vmatprep.subr.bf16.mxu0 0
    %341 = vmatpush1.bf16.msra.mxu0 0
    %342 = vmatprep.subr.bf16.mxu0 0
    %343 = vmatpush1.bf16.msra.mxu0 0
    %344 = vmatprep.subr.bf16.mxu0 0
    %345 = vmatpush1.bf16.msra.mxu0 0
    %346 = vmatprep.subr.bf16.mxu0 0
    %347 = vmatpush1.bf16.msra.mxu0 0
    %348 = vmatprep.subr.bf16.mxu0 0
    %349 = vmatpush1.bf16.msra.mxu0 0
    %350 = vmatprep.mubr.bf16.mxu0 0
    %351 = vmatmul.mubr.bf16.gmra.mrb[0].mxu0 %v316
    %v352 = vpop.f32.mrb[0].mxu0
    %v353 = vadd.f32 %v288, %v352
    %v354 = vpop.f32.mrb[0].mxu0
    %v355 = vpop.f32.mrb[0].mxu0
    %v356 = vpop.f32.mrb[0].mxu0
    %357 = vdwg.mxu0
    %v358 = vxor.u32 %v277, 2147483648
    %v359 = vmul.f32 %v358, 1.442695
    %v360 = vpow.pop %v359
    %v361 = vadd.f32 %v360, 1.0
    %v362 = vrcp.pop %v361
    %v363 = vmul.f32 1.0, %v362
    %v364 = vmul.f32 %v363, 2.0
    %v365 = vsub.f32 %v364, 1.0
    %367 = vrot.lane.b32.xlu0 %v209, 32
    %v368 = vpop.permute.xlu0 %367
    %v370 = vmul.f32 %v363, %v368
    %372 = vrot.lane.b32.xlu0 %v365, 64
    %v373 = vpop.permute.xlu0 %372
    %v375 = vmul.f32 %v363, %v373
    %377 = vrot.lane.b32.xlu0 %v375, 32
    %v378 = vpop.permute.xlu0 %377
    %v380 = vadd.f32 %v370, %v378
    %v381 = vtanh.pop %v380
    %383 = vrot.lane.b32.xlu0 %v381, 64
    %v384 = vpop.permute.xlu0 %383
    %v386 = vmul.f32 %v363, %v384
    %v387 = vxor.u32 %v353, 2147483648
    %v388 = vmul.f32 %v387, 1.442695
    %v389 = vpow.pop %v388
    %v390 = vadd.f32 %v389, 1.0
    %v391 = vrcp.pop %v390
    %v392 = vmul.f32 1.0, %v391
    %v393 = vmul.f32 %v392, 2.0
    %v394 = vsub.f32 %v393, 1.0
    %396 = vrot.lane.b32.xlu0 %v394, 64
    %v397 = vpop.permute.xlu0 %396
    %v399 = vmul.f32 %v392, %v397
    %v400 = vtanh.pop %v399
    %402 = vrot.lane.b32.xlu0 %v400, 96
    %v403 = vpop.permute.xlu0 %402
    %v405 = vmul.f32 %v392, %v403
    %v406 = vld [vmem:[#allocation2 + $0x10] sm:$0xff]
    %v407 = vpack.c.bf16 %v386, %v386
    %409 = vrot.lane.b32.xlu0 %v407, 32
    %v410 = vpop.permute.xlu0 %409
    %v412 = vsel %vm233, %v410, 0
    %414 = vmatprep.subr.bf16.mxu0 0
    %415 = vmatpush1.bf16.msra.mxu0 %v229
    %416 = vmatprep.subr.bf16.mxu0 0
    %417 = vmatpush1.bf16.msra.mxu0 %v230
    %418 = vmatprep.subr.bf16.mxu0 0
    %419 = vmatpush1.bf16.msra.mxu0 0
    %420 = vmatprep.subr.bf16.mxu0 0
    %421 = vmatpush1.bf16.msra.mxu0 0
    %422 = vmatprep.subr.bf16.mxu0 0
    %423 = vmatpush1.bf16.msra.mxu0 0
    %424 = vmatprep.subr.bf16.mxu0 0
    %425 = vmatpush1.bf16.msra.mxu0 0
    %426 = vmatprep.subr.bf16.mxu0 0
    %427 = vmatpush1.bf16.msra.mxu0 0
    %428 = vmatprep.subr.bf16.mxu0 0
    %429 = vmatpush1.bf16.msra.mxu0 0
    %430 = vmatprep.subr.bf16.mxu0 0
    %431 = vmatpush1.bf16.msra.mxu0 0
    %432 = vmatprep.subr.bf16.mxu0 0
    %433 = vmatpush1.bf16.msra.mxu0 0
    %434 = vmatprep.subr.bf16.mxu0 0
    %435 = vmatpush1.bf16.msra.mxu0 0
    %436 = vmatprep.subr.bf16.mxu0 0
    %437 = vmatpush1.bf16.msra.mxu0 0
    %438 = vmatprep.subr.bf16.mxu0 0
    %439 = vmatpush1.bf16.msra.mxu0 0
    %440 = vmatprep.subr.bf16.mxu0 0
    %441 = vmatpush1.bf16.msra.mxu0 0
    %442 = vmatprep.subr.bf16.mxu0 0
    %443 = vmatpush1.bf16.msra.mxu0 0
    %444 = vmatprep.subr.bf16.mxu0 0
    %445 = vmatpush1.bf16.msra.mxu0 0
    %446 = vmatprep.mubr.bf16.mxu0 0
    %447 = vmatmul.mubr.bf16.gmra.mrb[0].mxu0 %v412
    %v448 = vpop.f32.mrb[0].mxu0
    %v449 = vadd.f32 0.0, %v448
    %v450 = vpop.f32.mrb[0].mxu0
    %v451 = vpop.f32.mrb[0].mxu0
    %v452 = vpop.f32.mrb[0].mxu0
    %453 = vdwg.mxu0
    %v454 = vadd.f32 %v406, %v449
    %456 = vrot.lane.b32.xlu0 %v386, 32
    %v457 = vpop.permute.xlu0 %456
    %460 = vrot.lane.b32.xlu0 %v405, 64
    %v461 = vpop.permute.xlu0 %460
    %v463 = vsel %vm233, %v457, %v461
    %v464 = vpack.c.bf16 %v463, %v463
    %v466 = vsel %vm314, %v464, 0
    %468 = vmatprep.subr.bf16.mxu0 0
    %469 = vmatpush1.bf16.msra.mxu0 %v306
    %470 = vmatprep.subr.bf16.mxu0 0
    %471 = vmatpush1.bf16.msra.mxu0 %v307
    %472 = vmatprep.subr.bf16.mxu0 0
    %473 = vmatpush1.bf16.msra.mxu0 %v308
    %474 = vmatprep.subr.bf16.mxu0 0
    %475 = vmatpush1.bf16.msra.mxu0 %v309
    %476 = vmatprep.subr.bf16.mxu0 0
    %477 = vmatpush1.bf16.msra.mxu0 0
    %478 = vmatprep.subr.bf16.mxu0 0
    %479 = vmatpush1.bf16.msra.mxu0 0
    %480 = vmatprep.subr.bf16.mxu0 0
    %481 = vmatpush1.bf16.msra.mxu0 0
    %482 = vmatprep.subr.bf16.mxu0 0
    %483 = vmatpush1.bf16.msra.mxu0 0
    %484 = vmatprep.subr.bf16.mxu0 0
    %485 = vmatpush1.bf16.msra.mxu0 0
    %486 = vmatprep.subr.bf16.mxu0 0
    %487 = vmatpush1.bf16.msra.mxu0 0
    %488 = vmatprep.subr.bf16.mxu0 0
    %489 = vmatpush1.bf16.msra.mxu0 0
    %490 = vmatprep.subr.bf16.mxu0 0
    %491 = vmatpush1.bf16.msra.mxu0 0
    %492 = vmatprep.subr.bf16.mxu0 0
    %493 = vmatpush1.bf16.msra.mxu0 0
    %494 = vmatprep.subr.bf16.mxu0 0
    %495 = vmatpush1.bf16.msra.mxu0 0
    %496 = vmatprep.subr.bf16.mxu0 0
    %497 = vmatpush1.bf16.msra.mxu0 0
    %498 = vmatprep.subr.bf16.mxu0 0
    %499 = vmatpush1.bf16.msra.mxu0 0
    %500 = vmatprep.mubr.bf16.mxu0 0
    %501 = vmatmul.mubr.bf16.gmra.mrb[0].mxu0 %v466
    %v502 = vpop.f32.mrb[0].mxu0
    %v503 = vadd.f32 %v288, %v502
    %v504 = vpop.f32.mrb[0].mxu0
    %v505 = vpop.f32.mrb[0].mxu0
    %v506 = vpop.f32.mrb[0].mxu0
    %507 = vdwg.mxu0
    %v508 = vxor.u32 %v454, 2147483648
    %v509 = vmul.f32 %v508, 1.442695
    %v510 = vpow.pop %v509
    %v511 = vadd.f32 %v510, 1.0
    %v512 = vrcp.pop %v511
    %v513 = vmul.f32 1.0, %v512
    %v514 = vmul.f32 %v513, 2.0
    %v515 = vsub.f32 %v514, 1.0
    %v516 = vmul.f32 %v513, %v380
    %518 = vrot.lane.b32.xlu0 %v515, 64
    %v519 = vpop.permute.xlu0 %518
    %v521 = vmul.f32 %v513, %v519
    %523 = vrot.lane.b32.xlu0 %v521, 32
    %v524 = vpop.permute.xlu0 %523
    %v526 = vadd.f32 %v516, %v524
    %v527 = vtanh.pop %v526
    %529 = vrot.lane.b32.xlu0 %v527, 64
    %v530 = vpop.permute.xlu0 %529
    %v532 = vmul.f32 %v513, %v530
    %v533 = vxor.u32 %v503, 2147483648
    %v534 = vmul.f32 %v533, 1.442695
    %v535 = vpow.pop %v534
    %v536 = vadd.f32 %v535, 1.0
    %v537 = vrcp.pop %v536
    %v538 = vmul.f32 1.0, %v537
    %v539 = vmul.f32 %v538, 2.0
    %v540 = vsub.f32 %v539, 1.0
    %542 = vrot.lane.b32.xlu0 %v399, 32
    %v543 = vpop.permute.xlu0 %542
    %v545 = vmul.f32 %v538, %v543
    %547 = vrot.lane.b32.xlu0 %v540, 64
    %v548 = vpop.permute.xlu0 %547
    %v550 = vmul.f32 %v538, %v548
    %552 = vrot.lane.b32.xlu0 %v550, 32
    %v553 = vpop.permute.xlu0 %552
    %v555 = vadd.f32 %v545, %v553
    %v556 = vtanh.pop %v555
    %558 = vrot.lane.b32.xlu0 %v556, 64
    %v559 = vpop.permute.xlu0 %558
    %v561 = vmul.f32 %v538, %v559
    %v562 = vld [vmem:[#allocation2 + $0x18] sm:$0xff]
    %v563 = vpack.c.bf16 %v532, %v532
    %565 = vrot.lane.b32.xlu0 %v563, 32
    %v566 = vpop.permute.xlu0 %565
    %v568 = vsel %vm233, %v566, 0
    %570 = vmatprep.subr.bf16.mxu0 0
    %571 = vmatpush1.bf16.msra.mxu0 %v229
    %572 = vmatprep.subr.bf16.mxu0 0
    %573 = vmatpush1.bf16.msra.mxu0 %v230
    %574 = vmatprep.subr.bf16.mxu0 0
    %575 = vmatpush1.bf16.msra.mxu0 0
    %576 = vmatprep.subr.bf16.mxu0 0
    %577 = vmatpush1.bf16.msra.mxu0 0
    %578 = vmatprep.subr.bf16.mxu0 0
    %579 = vmatpush1.bf16.msra.mxu0 0
    %580 = vmatprep.subr.bf16.mxu0 0
    %581 = vmatpush1.bf16.msra.mxu0 0
    %582 = vmatprep.subr.bf16.mxu0 0
    %583 = vmatpush1.bf16.msra.mxu0 0
    %584 = vmatprep.subr.bf16.mxu0 0
    %585 = vmatpush1.bf16.msra.mxu0 0
    %586 = vmatprep.subr.bf16.mxu0 0
    %587 = vmatpush1.bf16.msra.mxu0 0
    %588 = vmatprep.subr.bf16.mxu0 0
    %589 = vmatpush1.bf16.msra.mxu0 0
    %590 = vmatprep.subr.bf16.mxu0 0
    %591 = vmatpush1.bf16.msra.mxu0 0
    %592 = vmatprep.subr.bf16.mxu0 0
    %593 = vmatpush1.bf16.msra.mxu0 0
    %594 = vmatprep.subr.bf16.mxu0 0
    %595 = vmatpush1.bf16.msra.mxu0 0
    %596 = vmatprep.subr.bf16.mxu0 0
    %597 = vmatpush1.bf16.msra.mxu0 0
    %598 = vmatprep.subr.bf16.mxu0 0
    %599 = vmatpush1.bf16.msra.mxu0 0
    %600 = vmatprep.subr.bf16.mxu0 0
    %601 = vmatpush1.bf16.msra.mxu0 0
    %602 = vmatprep.mubr.bf16.mxu0 0
    %603 = vmatmul.mubr.bf16.gmra.mrb[0].mxu0 %v568
    %v604 = vpop.f32.mrb[0].mxu0
    %v605 = vadd.f32 0.0, %v604
    %v606 = vpop.f32.mrb[0].mxu0
    %v607 = vpop.f32.mrb[0].mxu0
    %v608 = vpop.f32.mrb[0].mxu0
    %609 = vdwg.mxu0
    %v610 = vadd.f32 %v562, %v605
    %612 = vrot.lane.b32.xlu0 %v532, 32
    %v613 = vpop.permute.xlu0 %612
    %616 = vrot.lane.b32.xlu0 %v561, 64
    %v617 = vpop.permute.xlu0 %616
    %v619 = vsel %vm233, %v613, %v617
    %v620 = vpack.c.bf16 %v619, %v619
    %v622 = vsel %vm314, %v620, 0
    %624 = vmatprep.subr.bf16.mxu0 0
    %625 = vmatpush1.bf16.msra.mxu0 %v306
    %626 = vmatprep.subr.bf16.mxu0 0
    %627 = vmatpush1.bf16.msra.mxu0 %v307
    %628 = vmatprep.subr.bf16.mxu0 0
    %629 = vmatpush1.bf16.msra.mxu0 %v308
    %630 = vmatprep.subr.bf16.mxu0 0
    %631 = vmatpush1.bf16.msra.mxu0 %v309
    %632 = vmatprep.subr.bf16.mxu0 0
    %633 = vmatpush1.bf16.msra.mxu0 0
    %634 = vmatprep.subr.bf16.mxu0 0
    %635 = vmatpush1.bf16.msra.mxu0 0
    %636 = vmatprep.subr.bf16.mxu0 0
    %637 = vmatpush1.bf16.msra.mxu0 0
    %638 = vmatprep.subr.bf16.mxu0 0
    %639 = vmatpush1.bf16.msra.mxu0 0
    %640 = vmatprep.subr.bf16.mxu0 0
    %641 = vmatpush1.bf16.msra.mxu0 0
    %642 = vmatprep.subr.bf16.mxu0 0
    %643 = vmatpush1.bf16.msra.mxu0 0
    %644 = vmatprep.subr.bf16.mxu0 0
    %645 = vmatpush1.bf16.msra.mxu0 0
    %646 = vmatprep.subr.bf16.mxu0 0
    %647 = vmatpush1.bf16.msra.mxu0 0
    %648 = vmatprep.subr.bf16.mxu0 0
    %649 = vmatpush1.bf16.msra.mxu0 0
    %650 = vmatprep.subr.bf16.mxu0 0
    %651 = vmatpush1.bf16.msra.mxu0 0
    %652 = vmatprep.subr.bf16.mxu0 0
    %653 = vmatpush1.bf16.msra.mxu0 0
    %654 = vmatprep.subr.bf16.mxu0 0
    %655 = vmatpush1.bf16.msra.mxu0 0
    %656 = vmatprep.mubr.bf16.mxu0 0
    %657 = vmatmul.mubr.bf16.gmra.mrb[0].mxu0 %v622
    %v658 = vpop.f32.mrb[0].mxu0
    %v659 = vadd.f32 %v288, %v658
    %v660 = vpop.f32.mrb[0].mxu0
    %v661 = vpop.f32.mrb[0].mxu0
    %v662 = vpop.f32.mrb[0].mxu0
    %663 = vdwg.mxu0
    %v664 = vxor.u32 %v610, 2147483648
    %v665 = vmul.f32 %v664, 1.442695
    %v666 = vpow.pop %v665
    %v667 = vadd.f32 %v666, 1.0
    %v668 = vrcp.pop %v667
    %v669 = vmul.f32 1.0, %v668
    %v670 = vmul.f32 %v669, 2.0
    %v671 = vsub.f32 %v670, 1.0
    %v672 = vmul.f32 %v669, %v526
    %674 = vrot.lane.b32.xlu0 %v671, 64
    %v675 = vpop.permute.xlu0 %674
    %v677 = vmul.f32 %v669, %v675
    %679 = vrot.lane.b32.xlu0 %v677, 32
    %v680 = vpop.permute.xlu0 %679
    %v682 = vadd.f32 %v672, %v680
    %v683 = vtanh.pop %v682
    %685 = vrot.lane.b32.xlu0 %v683, 64
    %v686 = vpop.permute.xlu0 %685
    %v688 = vmul.f32 %v669, %v686
    %v689 = vxor.u32 %v659, 2147483648
    %v690 = vmul.f32 %v689, 1.442695
    %v691 = vpow.pop %v690
    %v692 = vadd.f32 %v691, 1.0
    %v693 = vrcp.pop %v692
    %v694 = vmul.f32 1.0, %v693
    %v695 = vmul.f32 %v694, 2.0
    %v696 = vsub.f32 %v695, 1.0
    %v697 = vmul.f32 %v694, %v555
    %699 = vrot.lane.b32.xlu0 %v696, 64
    %v700 = vpop.permute.xlu0 %699
    %v702 = vmul.f32 %v694, %v700
    %704 = vrot.lane.b32.xlu0 %v702, 32
    %v705 = vpop.permute.xlu0 %704
    %v707 = vadd.f32 %v697, %v705
    %v708 = vtanh.pop %v707
    %710 = vrot.lane.b32.xlu0 %v708, 64
    %v711 = vpop.permute.xlu0 %710
    %v713 = vmul.f32 %v694, %v711
    %v714 = vld [vmem:[#allocation2 + $0x20] sm:$0xff]
    %v715 = vpack.c.bf16 %v688, %v688
    %717 = vrot.lane.b32.xlu0 %v715, 32
    %v718 = vpop.permute.xlu0 %717
    %v720 = vsel %vm233, %v718, 0
    %722 = vmatprep.subr.bf16.mxu0 0
    %723 = vmatpush1.bf16.msra.mxu0 %v229
    %724 = vmatprep.subr.bf16.mxu0 0
    %725 = vmatpush1.bf16.msra.mxu0 %v230
    %726 = vmatprep.subr.bf16.mxu0 0
    %727 = vmatpush1.bf16.msra.mxu0 0
    %728 = vmatprep.subr.bf16.mxu0 0
    %729 = vmatpush1.bf16.msra.mxu0 0
    %730 = vmatprep.subr.bf16.mxu0 0
    %731 = vmatpush1.bf16.msra.mxu0 0
    %732 = vmatprep.subr.bf16.mxu0 0
    %733 = vmatpush1.bf16.msra.mxu0 0
    %734 = vmatprep.subr.bf16.mxu0 0
    %735 = vmatpush1.bf16.msra.mxu0 0
    %736 = vmatprep.subr.bf16.mxu0 0
    %737 = vmatpush1.bf16.msra.mxu0 0
    %738 = vmatprep.subr.bf16.mxu0 0
    %739 = vmatpush1.bf16.msra.mxu0 0
    %740 = vmatprep.subr.bf16.mxu0 0
    %741 = vmatpush1.bf16.msra.mxu0 0
    %742 = vmatprep.subr.bf16.mxu0 0
    %743 = vmatpush1.bf16.msra.mxu0 0
    %744 = vmatprep.subr.bf16.mxu0 0
    %745 = vmatpush1.bf16.msra.mxu0 0
    %746 = vmatprep.subr.bf16.mxu0 0
    %747 = vmatpush1.bf16.msra.mxu0 0
    %748 = vmatprep.subr.bf16.mxu0 0
    %749 = vmatpush1.bf16.msra.mxu0 0
    %750 = vmatprep.subr.bf16.mxu0 0
    %751 = vmatpush1.bf16.msra.mxu0 0
    %752 = vmatprep.subr.bf16.mxu0 0
    %753 = vmatpush1.bf16.msra.mxu0 0
    %754 = vmatprep.mubr.bf16.mxu0 0
    %755 = vmatmul.mubr.bf16.gmra.mrb[0].mxu0 %v720
    %v756 = vpop.f32.mrb[0].mxu0
    %v757 = vadd.f32 0.0, %v756
    %v758 = vpop.f32.mrb[0].mxu0
    %v759 = vpop.f32.mrb[0].mxu0
    %v760 = vpop.f32.mrb[0].mxu0
    %761 = vdwg.mxu0
    %v762 = vadd.f32 %v714, %v757
    %764 = vrot.lane.b32.xlu0 %v688, 32
    %v765 = vpop.permute.xlu0 %764
    %768 = vrot.lane.b32.xlu0 %v713, 64
    %v769 = vpop.permute.xlu0 %768
    %v771 = vsel %vm233, %v765, %v769
    %v772 = vpack.c.bf16 %v771, %v771
    %v774 = vsel %vm314, %v772, 0
    %776 = vmatprep.subr.bf16.mxu0 0
    %777 = vmatpush1.bf16.msra.mxu0 %v306
    %778 = vmatprep.subr.bf16.mxu0 0
    %779 = vmatpush1.bf16.msra.mxu0 %v307
    %780 = vmatprep.subr.bf16.mxu0 0
    %781 = vmatpush1.bf16.msra.mxu0 %v308
    %782 = vmatprep.subr.bf16.mxu0 0
    %783 = vmatpush1.bf16.msra.mxu0 %v309
    %784 = vmatprep.subr.bf16.mxu0 0
    %785 = vmatpush1.bf16.msra.mxu0 0
    %786 = vmatprep.subr.bf16.mxu0 0
    %787 = vmatpush1.bf16.msra.mxu0 0
    %788 = vmatprep.subr.bf16.mxu0 0
    %789 = vmatpush1.bf16.msra.mxu0 0
    %790 = vmatprep.subr.bf16.mxu0 0
    %791 = vmatpush1.bf16.msra.mxu0 0
    %792 = vmatprep.subr.bf16.mxu0 0
    %793 = vmatpush1.bf16.msra.mxu0 0
    %794 = vmatprep.subr.bf16.mxu0 0
    %795 = vmatpush1.bf16.msra.mxu0 0
    %796 = vmatprep.subr.bf16.mxu0 0
    %797 = vmatpush1.bf16.msra.mxu0 0
    %798 = vmatprep.subr.bf16.mxu0 0
    %799 = vmatpush1.bf16.msra.mxu0 0
    %800 = vmatprep.subr.bf16.mxu0 0
    %801 = vmatpush1.bf16.msra.mxu0 0
    %802 = vmatprep.subr.bf16.mxu0 0
    %803 = vmatpush1.bf16.msra.mxu0 0
    %804 = vmatprep.subr.bf16.mxu0 0
    %805 = vmatpush1.bf16.msra.mxu0 0
    %806 = vmatprep.subr.bf16.mxu0 0
    %807 = vmatpush1.bf16.msra.mxu0 0
    %808 = vmatprep.mubr.bf16.mxu0 0
    %809 = vmatmul.mubr.bf16.gmra.mrb[0].mxu0 %v774
    %v810 = vpop.f32.mrb[0].mxu0
    %v811 = vadd.f32 %v288, %v810
    %v812 = vpop.f32.mrb[0].mxu0
    %v813 = vpop.f32.mrb[0].mxu0
    %v814 = vpop.f32.mrb[0].mxu0
    %815 = vdwg.mxu0
    %v816 = vxor.u32 %v762, 2147483648
    %v817 = vmul.f32 %v816, 1.442695
    %v818 = vpow.pop %v817
    %v819 = vadd.f32 %v818, 1.0
    %v820 = vrcp.pop %v819
    %v821 = vmul.f32 1.0, %v820
    %v822 = vmul.f32 %v821, 2.0
    %v823 = vsub.f32 %v822, 1.0
    %v824 = vmul.f32 %v821, %v682
    %826 = vrot.lane.b32.xlu0 %v823, 64
    %v827 = vpop.permute.xlu0 %826
    %v829 = vmul.f32 %v821, %v827
    %831 = vrot.lane.b32.xlu0 %v829, 32
    %v832 = vpop.permute.xlu0 %831
    %v834 = vadd.f32 %v824, %v832
    %v835 = vtanh.pop %v834
    %837 = vrot.lane.b32.xlu0 %v835, 64
    %v838 = vpop.permute.xlu0 %837
    %v840 = vmul.f32 %v821, %v838
    %v841 = vxor.u32 %v811, 2147483648
    %v842 = vmul.f32 %v841, 1.442695
    %v843 = vpow.pop %v842
    %v844 = vadd.f32 %v843, 1.0
    %v845 = vrcp.pop %v844
    %v846 = vmul.f32 1.0, %v845
    %v847 = vmul.f32 %v846, 2.0
    %v848 = vsub.f32 %v847, 1.0
    %v849 = vmul.f32 %v846, %v707
    %851 = vrot.lane.b32.xlu0 %v848, 64
    %v852 = vpop.permute.xlu0 %851
    %v854 = vmul.f32 %v846, %v852
    %856 = vrot.lane.b32.xlu0 %v854, 32
    %v857 = vpop.permute.xlu0 %856
    %v859 = vadd.f32 %v849, %v857
    %v860 = vtanh.pop %v859
    %862 = vrot.lane.b32.xlu0 %v860, 64
    %v863 = vpop.permute.xlu0 %862
    %v865 = vmul.f32 %v846, %v863
    %v866 = vld [vmem:[#allocation2 + $0x28] sm:$0xff]
    %v867 = vpack.c.bf16 %v840, %v840
    %869 = vrot.lane.b32.xlu0 %v867, 32
    %v870 = vpop.permute.xlu0 %869
    %v872 = vsel %vm233, %v870, 0
    %874 = vmatprep.subr.bf16.mxu0 0
    %875 = vmatpush1.bf16.msra.mxu0 %v229
    %876 = vmatprep.subr.bf16.mxu0 0
    %877 = vmatpush1.bf16.msra.mxu0 %v230
    %878 = vmatprep.subr.bf16.mxu0 0
    %879 = vmatpush1.bf16.msra.mxu0 0
    %880 = vmatprep.subr.bf16.mxu0 0
    %881 = vmatpush1.bf16.msra.mxu0 0
    %882 = vmatprep.subr.bf16.mxu0 0
    %883 = vmatpush1.bf16.msra.mxu0 0
    %884 = vmatprep.subr.bf16.mxu0 0
    %885 = vmatpush1.bf16.msra.mxu0 0
    %886 = vmatprep.subr.bf16.mxu0 0
    %887 = vmatpush1.bf16.msra.mxu0 0
    %888 = vmatprep.subr.bf16.mxu0 0
    %889 = vmatpush1.bf16.msra.mxu0 0
    %890 = vmatprep.subr.bf16.mxu0 0
    %891 = vmatpush1.bf16.msra.mxu0 0
    %892 = vmatprep.subr.bf16.mxu0 0
    %893 = vmatpush1.bf16.msra.mxu0 0
    %894 = vmatprep.subr.bf16.mxu0 0
    %895 = vmatpush1.bf16.msra.mxu0 0
    %896 = vmatprep.subr.bf16.mxu0 0
    %897 = vmatpush1.bf16.msra.mxu0 0
    %898 = vmatprep.subr.bf16.mxu0 0
    %899 = vmatpush1.bf16.msra.mxu0 0
    %900 = vmatprep.subr.bf16.mxu0 0
    %901 = vmatpush1.bf16.msra.mxu0 0
    %902 = vmatprep.subr.bf16.mxu0 0
    %903 = vmatpush1.bf16.msra.mxu0 0
    %904 = vmatprep.subr.bf16.mxu0 0
    %905 = vmatpush1.bf16.msra.mxu0 0
    %906 = vmatprep.mubr.bf16.mxu0 0
    %907 = vmatmul.mubr.bf16.gmra.mrb[0].mxu0 %v872
    %v908 = vpop.f32.mrb[0].mxu0
    %v909 = vadd.f32 0.0, %v908
    %v910 = vpop.f32.mrb[0].mxu0
    %v911 = vpop.f32.mrb[0].mxu0
    %v912 = vpop.f32.mrb[0].mxu0
    %913 = vdwg.mxu0
    %v914 = vadd.f32 %v866, %v909
    %916 = vrot.lane.b32.xlu0 %v840, 32
    %v917 = vpop.permute.xlu0 %916
    %920 = vrot.lane.b32.xlu0 %v865, 64
    %v921 = vpop.permute.xlu0 %920
    %v923 = vsel %vm233, %v917, %v921
    %v924 = vpack.c.bf16 %v923, %v923
    %v926 = vsel %vm314, %v924, 0
    %928 = vmatprep.subr.bf16.mxu0 0
    %929 = vmatpush1.bf16.msra.mxu0 %v306
    %930 = vmatprep.subr.bf16.mxu0 0
    %931 = vmatpush1.bf16.msra.mxu0 %v307
    %932 = vmatprep.subr.bf16.mxu0 0
    %933 = vmatpush1.bf16.msra.mxu0 %v308
    %934 = vmatprep.subr.bf16.mxu0 0
    %935 = vmatpush1.bf16.msra.mxu0 %v309
    %936 = vmatprep.subr.bf16.mxu0 0
    %937 = vmatpush1.bf16.msra.mxu0 0
    %938 = vmatprep.subr.bf16.mxu0 0
    %939 = vmatpush1.bf16.msra.mxu0 0
    %940 = vmatprep.subr.bf16.mxu0 0
    %941 = vmatpush1.bf16.msra.mxu0 0
    %942 = vmatprep.subr.bf16.mxu0 0
    %943 = vmatpush1.bf16.msra.mxu0 0
    %944 = vmatprep.subr.bf16.mxu0 0
    %945 = vmatpush1.bf16.msra.mxu0 0
    %946 = vmatprep.subr.bf16.mxu0 0
    %947 = vmatpush1.bf16.msra.mxu0 0
    %948 = vmatprep.subr.bf16.mxu0 0
    %949 = vmatpush1.bf16.msra.mxu0 0
    %950 = vmatprep.subr.bf16.mxu0 0
    %951 = vmatpush1.bf16.msra.mxu0 0
    %952 = vmatprep.subr.bf16.mxu0 0
    %953 = vmatpush1.bf16.msra.mxu0 0
    %954 = vmatprep.subr.bf16.mxu0 0
    %955 = vmatpush1.bf16.msra.mxu0 0
    %956 = vmatprep.subr.bf16.mxu0 0
    %957 = vmatpush1.bf16.msra.mxu0 0
    %958 = vmatprep.subr.bf16.mxu0 0
    %959 = vmatpush1.bf16.msra.mxu0 0
    %960 = vmatprep.mubr.bf16.mxu0 0
    %961 = vmatmul.mubr.bf16.gmra.mrb[0].mxu0 %v926
    %v962 = vpop.f32.mrb[0].mxu0
    %v963 = vadd.f32 %v288, %v962
    %v964 = vpop.f32.mrb[0].mxu0
    %v965 = vpop.f32.mrb[0].mxu0
    %v966 = vpop.f32.mrb[0].mxu0
    %967 = vdwg.mxu0
    %v968 = vxor.u32 %v914, 2147483648
    %v969 = vmul.f32 %v968, 1.442695
    %v970 = vpow.pop %v969
    %v971 = vadd.f32 %v970, 1.0
    %v972 = vrcp.pop %v971
    %v973 = vmul.f32 1.0, %v972
    %v974 = vmul.f32 %v973, 2.0
    %v975 = vsub.f32 %v974, 1.0
    %v976 = vmul.f32 %v973, %v834
    %978 = vrot.lane.b32.xlu0 %v975, 64
    %v979 = vpop.permute.xlu0 %978
    %v981 = vmul.f32 %v973, %v979
    %983 = vrot.lane.b32.xlu0 %v981, 32
    %v984 = vpop.permute.xlu0 %983
    %v986 = vadd.f32 %v976, %v984
    %v987 = vtanh.pop %v986
    %989 = vrot.lane.b32.xlu0 %v987, 64
    %v990 = vpop.permute.xlu0 %989
    %v992 = vmul.f32 %v973, %v990
    %v993 = vxor.u32 %v963, 2147483648
    %v994 = vmul.f32 %v993, 1.442695
    %v995 = vpow.pop %v994
    %v996 = vadd.f32 %v995, 1.0
    %v997 = vrcp.pop %v996
    %v998 = vmul.f32 1.0, %v997
    %v999 = vmul.f32 %v998, 2.0
    %v1000 = vsub.f32 %v999, 1.0
    %v1001 = vmul.f32 %v998, %v859
    %1003 = vrot.lane.b32.xlu0 %v1000, 64
    %v1004 = vpop.permute.xlu0 %1003
    %v1006 = vmul.f32 %v998, %v1004
    %1008 = vrot.lane.b32.xlu0 %v1006, 32
    %v1009 = vpop.permute.xlu0 %1008
    %v1011 = vadd.f32 %v1001, %v1009
    %v1012 = vtanh.pop %v1011
    %1014 = vrot.lane.b32.xlu0 %v1012, 64
    %v1015 = vpop.permute.xlu0 %1014
    %v1017 = vmul.f32 %v998, %v1015
    %v1018 = vld [vmem:[#allocation2 + $0x30] sm:$0xff]
    %v1019 = vpack.c.bf16 %v992, %v992
    %1021 = vrot.lane.b32.xlu0 %v1019, 32
    %v1022 = vpop.permute.xlu0 %1021
    %v1024 = vsel %vm233, %v1022, 0
    %1026 = vmatprep.subr.bf16.mxu0 0
    %1027 = vmatpush1.bf16.msra.mxu0 %v229
    %1028 = vmatprep.subr.bf16.mxu0 0
    %1029 = vmatpush1.bf16.msra.mxu0 %v230
    %1030 = vmatprep.subr.bf16.mxu0 0
    %1031 = vmatpush1.bf16.msra.mxu0 0
    %1032 = vmatprep.subr.bf16.mxu0 0
    %1033 = vmatpush1.bf16.msra.mxu0 0
    %1034 = vmatprep.subr.bf16.mxu0 0
    %1035 = vmatpush1.bf16.msra.mxu0 0
    %1036 = vmatprep.subr.bf16.mxu0 0
    %1037 = vmatpush1.bf16.msra.mxu0 0
    %1038 = vmatprep.subr.bf16.mxu0 0
    %1039 = vmatpush1.bf16.msra.mxu0 0
    %1040 = vmatprep.subr.bf16.mxu0 0
    %1041 = vmatpush1.bf16.msra.mxu0 0
    %1042 = vmatprep.subr.bf16.mxu0 0
    %1043 = vmatpush1.bf16.msra.mxu0 0
    %1044 = vmatprep.subr.bf16.mxu0 0
    %1045 = vmatpush1.bf16.msra.mxu0 0
    %1046 = vmatprep.subr.bf16.mxu0 0
    %1047 = vmatpush1.bf16.msra.mxu0 0
    %1048 = vmatprep.subr.bf16.mxu0 0
    %1049 = vmatpush1.bf16.msra.mxu0 0
    %1050 = vmatprep.subr.bf16.mxu0 0
    %1051 = vmatpush1.bf16.msra.mxu0 0
    %1052 = vmatprep.subr.bf16.mxu0 0
    %1053 = vmatpush1.bf16.msra.mxu0 0
    %1054 = vmatprep.subr.bf16.mxu0 0
    %1055 = vmatpush1.bf16.msra.mxu0 0
    %1056 = vmatprep.subr.bf16.mxu0 0
    %1057 = vmatpush1.bf16.msra.mxu0 0
    %1058 = vmatprep.mubr.bf16.mxu0 0
    %1059 = vmatmul.mubr.bf16.gmra.mrb[0].mxu0 %v1024
    %v1060 = vpop.f32.mrb[0].mxu0
    %v1061 = vadd.f32 0.0, %v1060
    %v1062 = vpop.f32.mrb[0].mxu0
    %v1063 = vpop.f32.mrb[0].mxu0
    %v1064 = vpop.f32.mrb[0].mxu0
    %1065 = vdwg.mxu0
    %v1066 = vadd.f32 %v1018, %v1061
    %1068 = vrot.lane.b32.xlu0 %v992, 32
    %v1069 = vpop.permute.xlu0 %1068
    %1072 = vrot.lane.b32.xlu0 %v1017, 64
    %v1073 = vpop.permute.xlu0 %1072
    %v1075 = vsel %vm233, %v1069, %v1073
    %v1076 = vpack.c.bf16 %v1075, %v1075
    %v1078 = vsel %vm314, %v1076, 0
    %1080 = vmatprep.subr.bf16.mxu0 0
    %1081 = vmatpush1.bf16.msra.mxu0 %v306
    %1082 = vmatprep.subr.bf16.mxu0 0
    %1083 = vmatpush1.bf16.msra.mxu0 %v307
    %1084 = vmatprep.subr.bf16.mxu0 0
    %1085 = vmatpush1.bf16.msra.mxu0 %v308
    %1086 = vmatprep.subr.bf16.mxu0 0
    %1087 = vmatpush1.bf16.msra.mxu0 %v309
    %1088 = vmatprep.subr.bf16.mxu0 0
    %1089 = vmatpush1.bf16.msra.mxu0 0
    %1090 = vmatprep.subr.bf16.mxu0 0
    %1091 = vmatpush1.bf16.msra.mxu0 0
    %1092 = vmatprep.subr.bf16.mxu0 0
    %1093 = vmatpush1.bf16.msra.mxu0 0
    %1094 = vmatprep.subr.bf16.mxu0 0
    %1095 = vmatpush1.bf16.msra.mxu0 0
    %1096 = vmatprep.subr.bf16.mxu0 0
    %1097 = vmatpush1.bf16.msra.mxu0 0
    %1098 = vmatprep.subr.bf16.mxu0 0
    %1099 = vmatpush1.bf16.msra.mxu0 0
    %1100 = vmatprep.subr.bf16.mxu0 0
    %1101 = vmatpush1.bf16.msra.mxu0 0
    %1102 = vmatprep.subr.bf16.mxu0 0
    %1103 = vmatpush1.bf16.msra.mxu0 0
    %1104 = vmatprep.subr.bf16.mxu0 0
    %1105 = vmatpush1.bf16.msra.mxu0 0
    %1106 = vmatprep.subr.bf16.mxu0 0
    %1107 = vmatpush1.bf16.msra.mxu0 0
    %1108 = vmatprep.subr.bf16.mxu0 0
    %1109 = vmatpush1.bf16.msra.mxu0 0
    %1110 = vmatprep.subr.bf16.mxu0 0
    %1111 = vmatpush1.bf16.msra.mxu0 0
    %1112 = vmatprep.mubr.bf16.mxu0 0
    %1113 = vmatmul.mubr.bf16.gmra.mrb[0].mxu0 %v1078
    %v1114 = vpop.f32.mrb[0].mxu0
    %v1115 = vadd.f32 %v288, %v1114
    %v1116 = vpop.f32.mrb[0].mxu0
    %v1117 = vpop.f32.mrb[0].mxu0
    %v1118 = vpop.f32.mrb[0].mxu0
    %1119 = vdwg.mxu0
    %v1120 = vxor.u32 %v1066, 2147483648
    %v1121 = vmul.f32 %v1120, 1.442695
    %v1122 = vpow.pop %v1121
    %v1123 = vadd.f32 %v1122, 1.0
    %v1124 = vrcp.pop %v1123
    %v1125 = vmul.f32 1.0, %v1124
    %v1126 = vmul.f32 %v1125, 2.0
    %v1127 = vsub.f32 %v1126, 1.0
    %v1128 = vmul.f32 %v1125, %v986
    %1130 = vrot.lane.b32.xlu0 %v1127, 64
    %v1131 = vpop.permute.xlu0 %1130
    %v1133 = vmul.f32 %v1125, %v1131
    %1135 = vrot.lane.b32.xlu0 %v1133, 32
    %v1136 = vpop.permute.xlu0 %1135
    %v1138 = vadd.f32 %v1128, %v1136
    %v1139 = vtanh.pop %v1138
    %1141 = vrot.lane.b32.xlu0 %v1139, 64
    %v1142 = vpop.permute.xlu0 %1141
    %v1144 = vmul.f32 %v1125, %v1142
    %v1145 = vxor.u32 %v1115, 2147483648
    %v1146 = vmul.f32 %v1145, 1.442695
    %v1147 = vpow.pop %v1146
    %v1148 = vadd.f32 %v1147, 1.0
    %v1149 = vrcp.pop %v1148
    %v1150 = vmul.f32 1.0, %v1149
    %v1151 = vmul.f32 %v1150, 2.0
    %v1152 = vsub.f32 %v1151, 1.0
    %v1153 = vmul.f32 %v1150, %v1011
    %1155 = vrot.lane.b32.xlu0 %v1152, 64
    %v1156 = vpop.permute.xlu0 %1155
    %v1158 = vmul.f32 %v1150, %v1156
    %1160 = vrot.lane.b32.xlu0 %v1158, 32
    %v1161 = vpop.permute.xlu0 %1160
    %v1163 = vadd.f32 %v1153, %v1161
    %v1164 = vtanh.pop %v1163
    %1166 = vrot.lane.b32.xlu0 %v1164, 64
    %v1167 = vpop.permute.xlu0 %1166
    %v1169 = vmul.f32 %v1150, %v1167
    %v1170 = vld [vmem:[#allocation2 + $0x38] sm:$0xff]
    %v1171 = vpack.c.bf16 %v1144, %v1144
    %1173 = vrot.lane.b32.xlu0 %v1171, 32
    %v1174 = vpop.permute.xlu0 %1173
    %v1176 = vsel %vm233, %v1174, 0
    %1178 = vmatprep.subr.bf16.mxu0 0
    %1179 = vmatpush1.bf16.msra.mxu0 %v229
    %1180 = vmatprep.subr.bf16.mxu0 0
    %1181 = vmatpush1.bf16.msra.mxu0 %v230
    %1182 = vmatprep.subr.bf16.mxu0 0
    %1183 = vmatpush1.bf16.msra.mxu0 0
    %1184 = vmatprep.subr.bf16.mxu0 0
    %1185 = vmatpush1.bf16.msra.mxu0 0
    %1186 = vmatprep.subr.bf16.mxu0 0
    %1187 = vmatpush1.bf16.msra.mxu0 0
    %1188 = vmatprep.subr.bf16.mxu0 0
    %1189 = vmatpush1.bf16.msra.mxu0 0
    %1190 = vmatprep.subr.bf16.mxu0 0
    %1191 = vmatpush1.bf16.msra.mxu0 0
    %1192 = vmatprep.subr.bf16.mxu0 0
    %1193 = vmatpush1.bf16.msra.mxu0 0
    %1194 = vmatprep.subr.bf16.mxu0 0
    %1195 = vmatpush1.bf16.msra.mxu0 0
    %1196 = vmatprep.subr.bf16.mxu0 0
    %1197 = vmatpush1.bf16.msra.mxu0 0
    %1198 = vmatprep.subr.bf16.mxu0 0
    %1199 = vmatpush1.bf16.msra.mxu0 0
    %1200 = vmatprep.subr.bf16.mxu0 0
    %1201 = vmatpush1.bf16.msra.mxu0 0
    %1202 = vmatprep.subr.bf16.mxu0 0
    %1203 = vmatpush1.bf16.msra.mxu0 0
    %1204 = vmatprep.subr.bf16.mxu0 0
    %1205 = vmatpush1.bf16.msra.mxu0 0
    %1206 = vmatprep.subr.bf16.mxu0 0
    %1207 = vmatpush1.bf16.msra.mxu0 0
    %1208 = vmatprep.subr.bf16.mxu0 0
    %1209 = vmatpush1.bf16.msra.mxu0 0
    %1210 = vmatprep.mubr.bf16.mxu0 0
    %1211 = vmatmul.mubr.bf16.gmra.mrb[0].mxu0 %v1176
    %v1212 = vpop.f32.mrb[0].mxu0
    %v1213 = vadd.f32 0.0, %v1212
    %v1214 = vpop.f32.mrb[0].mxu0
    %v1215 = vpop.f32.mrb[0].mxu0
    %v1216 = vpop.f32.mrb[0].mxu0
    %1217 = vdwg.mxu0
    %v1218 = vadd.f32 %v1170, %v1213
    %1220 = vrot.lane.b32.xlu0 %v1144, 32
    %v1221 = vpop.permute.xlu0 %1220
    %1224 = vrot.lane.b32.xlu0 %v1169, 64
    %v1225 = vpop.permute.xlu0 %1224
    %v1227 = vsel %vm233, %v1221, %v1225
    %v1228 = vpack.c.bf16 %v1227, %v1227
    %v1230 = vsel %vm314, %v1228, 0
    %1232 = vmatprep.subr.bf16.mxu0 0
    %1233 = vmatpush1.bf16.msra.mxu0 %v306
    %1234 = vmatprep.subr.bf16.mxu0 0
    %1235 = vmatpush1.bf16.msra.mxu0 %v307
    %1236 = vmatprep.subr.bf16.mxu0 0
    %1237 = vmatpush1.bf16.msra.mxu0 %v308
    %1238 = vmatprep.subr.bf16.mxu0 0
    %1239 = vmatpush1.bf16.msra.mxu0 %v309
    %1240 = vmatprep.subr.bf16.mxu0 0
    %1241 = vmatpush1.bf16.msra.mxu0 0
    %1242 = vmatprep.subr.bf16.mxu0 0
    %1243 = vmatpush1.bf16.msra.mxu0 0
    %1244 = vmatprep.subr.bf16.mxu0 0
    %1245 = vmatpush1.bf16.msra.mxu0 0
    %1246 = vmatprep.subr.bf16.mxu0 0
    %1247 = vmatpush1.bf16.msra.mxu0 0
    %1248 = vmatprep.subr.bf16.mxu0 0
    %1249 = vmatpush1.bf16.msra.mxu0 0
    %1250 = vmatprep.subr.bf16.mxu0 0
    %1251 = vmatpush1.bf16.msra.mxu0 0
    %1252 = vmatprep.subr.bf16.mxu0 0
    %1253 = vmatpush1.bf16.msra.mxu0 0
    %1254 = vmatprep.subr.bf16.mxu0 0
    %1255 = vmatpush1.bf16.msra.mxu0 0
    %1256 = vmatprep.subr.bf16.mxu0 0
    %1257 = vmatpush1.bf16.msra.mxu0 0
    %1258 = vmatprep.subr.bf16.mxu0 0
    %1259 = vmatpush1.bf16.msra.mxu0 0
    %1260 = vmatprep.subr.bf16.mxu0 0
    %1261 = vmatpush1.bf16.msra.mxu0 0
    %1262 = vmatprep.subr.bf16.mxu0 0
    %1263 = vmatpush1.bf16.msra.mxu0 0
    %1264 = vmatprep.mubr.bf16.mxu0 0
    %1265 = vmatmul.mubr.bf16.gmra.mrb[0].mxu0 %v1230
    %v1266 = vpop.f32.mrb[0].mxu0
    %v1267 = vadd.f32 %v288, %v1266
    %v1268 = vpop.f32.mrb[0].mxu0
    %v1269 = vpop.f32.mrb[0].mxu0
    %v1270 = vpop.f32.mrb[0].mxu0
    %1271 = vdwg.mxu0
    %v1272 = vxor.u32 %v1218, 2147483648
    %v1273 = vmul.f32 %v1272, 1.442695
    %v1274 = vpow.pop %v1273
    %v1275 = vadd.f32 %v1274, 1.0
    %v1276 = vrcp.pop %v1275
    %v1277 = vmul.f32 1.0, %v1276
    %v1278 = vmul.f32 %v1277, 2.0
    %v1279 = vsub.f32 %v1278, 1.0
    %v1280 = vmul.f32 %v1277, %v1138
    %1282 = vrot.lane.b32.xlu0 %v1279, 64
    %v1283 = vpop.permute.xlu0 %1282
    %v1285 = vmul.f32 %v1277, %v1283
    %1287 = vrot.lane.b32.xlu0 %v1285, 32
    %v1288 = vpop.permute.xlu0 %1287
    %v1290 = vadd.f32 %v1280, %v1288
    %v1291 = vtanh.pop %v1290
    %1293 = vrot.lane.b32.xlu0 %v1291, 64
    %v1294 = vpop.permute.xlu0 %1293
    %v1296 = vmul.f32 %v1277, %v1294
    %v1297 = vxor.u32 %v1267, 2147483648
    %v1298 = vmul.f32 %v1297, 1.442695
    %v1299 = vpow.pop %v1298
    %v1300 = vadd.f32 %v1299, 1.0
    %v1301 = vrcp.pop %v1300
    %v1302 = vmul.f32 1.0, %v1301
    %v1303 = vmul.f32 %v1302, 2.0
    %v1304 = vsub.f32 %v1303, 1.0
    %v1305 = vmul.f32 %v1302, %v1163
    %1307 = vrot.lane.b32.xlu0 %v1304, 64
    %v1308 = vpop.permute.xlu0 %1307
    %v1310 = vmul.f32 %v1302, %v1308
    %1312 = vrot.lane.b32.xlu0 %v1310, 32
    %v1313 = vpop.permute.xlu0 %1312
    %v1315 = vadd.f32 %v1305, %v1313
    %v1316 = vtanh.pop %v1315
    %1318 = vrot.lane.b32.xlu0 %v1316, 64
    %v1319 = vpop.permute.xlu0 %1318
    %v1321 = vmul.f32 %v1302, %v1319
    %1323 = vrot.lane.b32.xlu0 %v1296, 32
    %v1324 = vpop.permute.xlu0 %1323
    %1327 = vrot.lane.b32.xlu0 %v1321, 64
    %v1328 = vpop.permute.xlu0 %1327
    %v1330 = vsel %vm233, %v1324, %v1328
    %v1331 = vpack.c.bf16 %v1330, %v1330
    %v1333 = vsel %vm314, %v1331, 0
    %1335 = vmatprep.subr.bf16.mxu0 0
    %1336 = vmatpush1.bf16.msra.mxu0 %v306
    %1337 = vmatprep.subr.bf16.mxu0 0
    %1338 = vmatpush1.bf16.msra.mxu0 %v307
    %1339 = vmatprep.subr.bf16.mxu0 0
    %1340 = vmatpush1.bf16.msra.mxu0 %v308
    %1341 = vmatprep.subr.bf16.mxu0 0
    %1342 = vmatpush1.bf16.msra.mxu0 %v309
    %1343 = vmatprep.subr.bf16.mxu0 0
    %1344 = vmatpush1.bf16.msra.mxu0 0
    %1345 = vmatprep.subr.bf16.mxu0 0
    %1346 = vmatpush1.bf16.msra.mxu0 0
    %1347 = vmatprep.subr.bf16.mxu0 0
    %1348 = vmatpush1.bf16.msra.mxu0 0
    %1349 = vmatprep.subr.bf16.mxu0 0
    %1350 = vmatpush1.bf16.msra.mxu0 0
    %1351 = vmatprep.subr.bf16.mxu0 0
    %1352 = vmatpush1.bf16.msra.mxu0 0
    %1353 = vmatprep.subr.bf16.mxu0 0
    %1354 = vmatpush1.bf16.msra.mxu0 0
    %1355 = vmatprep.subr.bf16.mxu0 0
    %1356 = vmatpush1.bf16.msra.mxu0 0
    %1357 = vmatprep.subr.bf16.mxu0 0
    %1358 = vmatpush1.bf16.msra.mxu0 0
    %1359 = vmatprep.subr.bf16.mxu0 0
    %1360 = vmatpush1.bf16.msra.mxu0 0
    %1361 = vmatprep.subr.bf16.mxu0 0
    %1362 = vmatpush1.bf16.msra.mxu0 0
    %1363 = vmatprep.subr.bf16.mxu0 0
    %1364 = vmatpush1.bf16.msra.mxu0 0
    %1365 = vmatprep.subr.bf16.mxu0 0
    %1366 = vmatpush1.bf16.msra.mxu0 0
    %1367 = vmatprep.mubr.bf16.mxu0 0
    %1368 = vmatmul.mubr.bf16.gmra.mrb[0].mxu0 %v1333
    %v1369 = vpop.f32.mrb[0].mxu0
    %v1370 = vadd.f32 %v288, %v1369
    %v1371 = vpop.f32.mrb[0].mxu0
    %v1372 = vpop.f32.mrb[0].mxu0
    %v1373 = vpop.f32.mrb[0].mxu0
    %1374 = vdwg.mxu0
    %v1375 = vxor.u32 %v1370, 2147483648
    %v1376 = vmul.f32 %v1375, 1.442695
    %v1377 = vpow.pop %v1376
    %v1378 = vadd.f32 %v1377, 1.0
    %v1379 = vrcp.pop %v1378
    %v1380 = vmul.f32 1.0, %v1379
    %v1381 = vmul.f32 %v1380, 2.0
    %v1382 = vsub.f32 %v1381, 1.0
    %v1383 = vmul.f32 %v1380, %v1315
    %1385 = vrot.lane.b32.xlu0 %v1382, 64
    %v1386 = vpop.permute.xlu0 %1385
    %v1388 = vmul.f32 %v1380, %v1386
    %1390 = vrot.lane.b32.xlu0 %v1388, 32
    %v1391 = vpop.permute.xlu0 %1390
    %v1393 = vadd.f32 %v1383, %v1391
    %v1394 = vtanh.pop %v1393
    %1396 = vrot.lane.b32.xlu0 %v1394, 64
    %v1397 = vpop.permute.xlu0 %1396
    %v1399 = vmul.f32 %v1380, %v1397
    %v1400 = vpack.c.bf16 %v1399, %v1399
    %v1401 = vld [vmem:[#allocation6] sm:$0xf]
    %v1402 = vld [vmem:[#allocation6 + $0x4] sm:$0xf]
    %v1403 = vld [vmem:[#allocation6 + $0x8] sm:$0xf]
    %v1404 = vld [vmem:[#allocation6 + $0xc] sm:$0xf]
    %v1405 = vld [vmem:[%s7] sm:$0x1]
    %v1407 = vlaneseq
    %v1408 = vshrl.u32 %v1407, 7
    %v1409 = vsub.s32 0, %v1408
    %v1410 = vrot.slane %v1405, %v1409
    %1413 = vrot.lane.b32.xlu0 %v1400, 32
    %v1414 = vpop.permute.xlu0 %1413
    %v1419 = vunpack.c.l.b16 %v1401
    %v1420 = vunpack.c.l.b16 %v1402
    %v1421 = vunpack.c.l.b16 %v1403
    %v1422 = vunpack.c.l.b16 %v1404
    %v1423 = vpack.c.b16 %v1420, %v1419
    %v1424 = vpack.c.b16 %v1422, %v1421
    %v1428 = vsel %vm233, %v1414, 0
    %1430 = vmatprep.subr.bf16.mxu0 0
    %1431 = vmatpush1.bf16.msra.mxu0 %v1423
    %1432 = vmatprep.subr.bf16.mxu0 0
    %1433 = vmatpush1.bf16.msra.mxu0 %v1424
    %1434 = vmatprep.subr.bf16.mxu0 0
    %1435 = vmatpush1.bf16.msra.mxu0 0
    %1436 = vmatprep.subr.bf16.mxu0 0
    %1437 = vmatpush1.bf16.msra.mxu0 0
    %1438 = vmatprep.subr.bf16.mxu0 0
    %1439 = vmatpush1.bf16.msra.mxu0 0
    %1440 = vmatprep.subr.bf16.mxu0 0
    %1441 = vmatpush1.bf16.msra.mxu0 0
    %1442 = vmatprep.subr.bf16.mxu0 0
    %1443 = vmatpush1.bf16.msra.mxu0 0
    %1444 = vmatprep.subr.bf16.mxu0 0
    %1445 = vmatpush1.bf16.msra.mxu0 0
    %1446 = vmatprep.subr.bf16.mxu0 0
    %1447 = vmatpush1.bf16.msra.mxu0 0
    %1448 = vmatprep.subr.bf16.mxu0 0
    %1449 = vmatpush1.bf16.msra.mxu0 0
    %1450 = vmatprep.subr.bf16.mxu0 0
    %1451 = vmatpush1.bf16.msra.mxu0 0
    %1452 = vmatprep.subr.bf16.mxu0 0
    %1453 = vmatpush1.bf16.msra.mxu0 0
    %1454 = vmatprep.subr.bf16.mxu0 0
    %1455 = vmatpush1.bf16.msra.mxu0 0
    %1456 = vmatprep.subr.bf16.mxu0 0
    %1457 = vmatpush1.bf16.msra.mxu0 0
    %1458 = vmatprep.subr.bf16.mxu0 0
    %1459 = vmatpush1.bf16.msra.mxu0 0
    %1460 = vmatprep.subr.bf16.mxu0 0
    %1461 = vmatpush1.bf16.msra.mxu0 0
    %1462 = vmatprep.mubr.bf16.mxu0 0
    %1463 = vmatmul.mubr.bf16.gmra.mrb[0].mxu0 %v1428
    %v1464 = vpop.f32.mrb[0].mxu0
    %v1465 = vadd.f32 %v1410, %v1464
    %v1466 = vpop.f32.mrb[0].mxu0
    %v1467 = vpop.f32.mrb[0].mxu0
    %v1468 = vpop.f32.mrb[0].mxu0
    %1469 = vdwg.mxu0
    %1470 = vst [vmem:[#allocation8] sm:$0xff] %v1465
    // Predicated region
    $region42: #{tpu_custom_call.1} parent=1 // pred_check
      _
    $region43: #{tpu_custom_call.1} parent=1 // pred_check_branch
      %1472 = sbr.rel (0) target = $region45
    $region44: #{tpu_custom_call.1} parent=1 // pred_region
      %s1474 = ssub.s32 128, 128
      %1475 = vsyncadd [#allocation5], %s1474
      %s1477 = sshll.u32 [#allocation8], 4
      %s1478 = int_to_ptr.vmem [resolvable:$true] %s1477
      %1480 = dma.vmem_to_hbm [thread:$0]  %s1478, 128, %s8, [#allocation5]
    $region45: #{tpu_custom_call.1} parent=1 // pred_fallthru
      _
    // Predicated region
    $region46: #{tpu_custom_call.1} parent=1 // pred_check
      _
    $region47: #{tpu_custom_call.1} parent=1 // pred_check_branch
      %1482 = sbr.rel (0) target = $region49
    $region48: #{tpu_custom_call.1} parent=1 // pred_region
      %1483 = dma.done [#allocation5], 128
    $region49: #{tpu_custom_call.1} parent=1 // pred_fallthru
      _
    %1484 = vsyncpa [#allocation4], 1
    %1485 = vsyncpa [#allocation7], 1
    %1486 = vsyncpa [#allocation5], 1

</llo_original>
